<compile_context>
chip_gen: v5e
topology: v5e:2x2
jax: 0.10.0
libtpu: 0.0.40
codegen_flags: <defaults>
</compile_context>

<pallas_src>
import functools
import numpy as np
import jax
import jax.numpy as jnp
from jax.experimental import pallas as pl
from jax.experimental.pallas import tpu as pltpu


# ----------------------------------------------------------------------------
# Host-side glue: separable linear operators matching PyTorch semantics.
# ----------------------------------------------------------------------------
def _cubic_weights(t, A=-0.75):
    """PyTorch upsample_bicubic coefficients for fractional offset t in [0,1)."""
    def f1(x):  # |x| <= 1
        return ((A + 2.0) * x - (A + 3.0)) * x * x + 1.0

    def f2(x):  # 1 < |x| < 2
        return ((A * x - 5.0 * A) * x + 8.0 * A) * x - 4.0 * A

    return np.array([f2(t + 1.0), f1(t), f1(1.0 - t), f2(2.0 - t)],
                    dtype=np.float64)


def bicubic_matrix(in_size, out_size):
    """(out_size, in_size) matrix equal to F.interpolate(..., 'bicubic',
    align_corners=False) along one axis."""
    M = np.zeros((out_size, in_size), dtype=np.float64)
    scale = in_size / out_size
    for j in range(out_size):
        src = (j + 0.5) * scale - 0.5          # not clamped for cubic (PyTorch)
        i0 = int(np.floor(src))
        t = src - i0
        w = _cubic_weights(t)
        for k in range(4):
            idx = min(max(i0 - 1 + k, 0), in_size - 1)   # clamp (edge replicate)
            M[j, idx] += w[k]
    return M


def blur_matrix(size, kernel_size, stddev):
    """(size, size) matrix equal to reflect-pad + 1D gaussian conv."""
    assert kernel_size // 2 <= size - 1, \
        "plane smaller than blur half-width (reflect pad undefined)"
    t = np.arange(kernel_size, dtype=np.float64) - (kernel_size - 1) / 2.0
    g = np.exp(-(t ** 2) / (2.0 * stddev ** 2))
    g /= g.sum()
    p = kernel_size // 2

    def reflect(i):
        if i < 0:
            return -i
        if i >= size:
            return 2 * (size - 1) - i
        return i

    B = np.zeros((size, size), dtype=np.float64)
    for out in range(size):
        for k in range(kernel_size):
            B[out, reflect(out + k - p)] += g[k]
    return B


def _round_up(v, m):
    return (v + m - 1) // m * m


def build_base_and_delta_operators(Hi, Wi, Ho, Wo, kernel_size, stddev,
                                   num_layers):
    """base = K_0^T (Hi*Wi, Ho*Wo) and deltas[l] = (K_{l+1}-K_l)^T.

    K_l = kron(A_h @ B_h^l, A_w @ B_w^l).  Deltas are formed in float64
    BEFORE any low-precision cast (avoids catastrophic cancellation)."""
    A_h = bicubic_matrix(Hi, Ho)                 # (Ho, Hi)
    A_w = bicubic_matrix(Wi, Wo)                 # (Wo, Wi)
    B_h = blur_matrix(Hi, kernel_size, stddev)   # (Hi, Hi)
    B_w = blur_matrix(Wi, kernel_size, stddev)   # (Wi, Wi)

    Bh_pow = np.eye(Hi)
    Bw_pow = np.eye(Wi)
    kts = []
    for _ in range(num_layers + 1):
        # r_l[i*Wo+j] = sum_{p*Wi+q} D_h[i,p]*D_w[j,q]*x[p*Wi+q] (row-major vec)
        kts.append(np.kron(A_h @ Bh_pow, A_w @ Bw_pow).T)   # (Hi*Wi, Ho*Wo)
        Bh_pow = Bh_pow @ B_h
        Bw_pow = Bw_pow @ B_w
    base = kts[0]
    if num_layers > 0:
        deltas = np.stack([kts[l + 1] - kts[l] for l in range(num_layers)], 0)
    else:
        deltas = np.zeros((0,) + base.shape, dtype=np.float64)
    return base, deltas


def _device_operators(base, deltas, weights, compute_dtype):
    """ops[0] = K_0^T, ops[l+1] = w_l * (K_{l+1}-K_l)^T, cast to compute dtype.
    The (traced) weights are folded on device so they stay live parameters."""
    base = jnp.asarray(base, jnp.float32)
    deltas = jnp.asarray(deltas, jnp.float32)
    w = jnp.asarray(weights, jnp.float32).reshape(-1)
    scaled = deltas * w[:, None, None]
    ops = jnp.concatenate([base[None], scaled], axis=0)     # (L+1, K, Nd) f32
    return ops.astype(compute_dtype)


# ----------------------------------------------------------------------------
# VMEM budgeting / block selection (generation-aware).
# ----------------------------------------------------------------------------
def _vmem_budget_bytes():
    cap = 64 * 1024 * 1024          # conservative fallback (v7x per-TC VMEM)
    try:
        cap = int(pltpu.get_tpu_info().vmem_capacity_bytes)
    except Exception:
        pass
    return (cap * 3) // 4            # leave headroom for compiler scratch


def _pick_blocks(NC, Kp, Np, num_layers, op_bytes, budget):
    """Largest (m_blk, n_blk) whose padded, double-buffered operands fit."""
    n_cands = sorted({d for d in range(128, min(512, Np) + 1, 128)
                      if Np % d == 0}, reverse=True)
    if not n_cands:
        n_cands = [Np]
    m_top = min(256, _round_up(NC, 16))
    m_cands = []
    for m in (m_top, 128, 64, 32, 16):
        if m <= m_top and m not in m_cands:
            m_cands.append(m)

    def need(m_blk, n_blk):
        return (2 * (num_layers + 1) * Kp * n_blk * op_bytes   # kt, dbl-buffered
                + 2 * m_blk * Kp * op_bytes                    # x,  dbl-buffered
                + 2 * m_blk * n_blk * 4                        # out, dbl-buffered
                + 2 * m_blk * n_blk * 4)                       # live f32 net/rd

    for m_blk in m_cands:
        for n_blk in n_cands:
            nb = need(m_blk, n_blk)
            if nb <= budget:
                return m_blk, n_blk, nb
    # TODO(synk): stream one operator level per "arbitrary" grid step (or fall
    # back to per-plane two-sided matmuls) instead of failing for huge planes.
    raise ValueError("MullerResizer Kronecker operators exceed the VMEM budget")


# ----------------------------------------------------------------------------
# Pallas kernel: one (row-block, lane-block) tile of the plane batch per step.
# ----------------------------------------------------------------------------
def muller_kron_kernel(b_ref, kt_ref, x_ref, o_ref, *, num_layers):
    x = x_ref[...]                                       # (m_blk, Kp)   bf16
    net = jnp.dot(x, kt_ref[0], preferred_element_type=jnp.float32)
    for l in range(num_layers):
        rd = jnp.dot(x, kt_ref[l + 1], preferred_element_type=jnp.float32)
        net = net + jnp.tanh(rd + b_ref[l])              # EUP tanh, SMEM scalar
    o_ref[...] = net.astype(o_ref.dtype)


# ----------------------------------------------------------------------------
# Wrapper
# ----------------------------------------------------------------------------
def muller_resizer(x, target_size, weights, biases, *, kernel_size=5,
                   stddev=1.0, num_layers=2, avg_pool=False,
                   compute_dtype=jnp.bfloat16):
    """x: (N, C, H, W) float32.  Returns (N, C, Ho, Wo) float32."""
    assert not avg_pool, "avg_pool=True path not implemented"
    assert num_layers >= 1
    N, C, Hi, Wi = x.shape
    Ho, Wo = target_size
    NC, Kdim, Ndim = N * C, Hi * Wi, Ho * Wo
    Kp, Np = _round_up(Kdim, 128), _round_up(Ndim, 128)
    op_bytes = jnp.dtype(compute_dtype).itemsize

    budget = _vmem_budget_bytes()
    m_blk, n_blk, need = _pick_blocks(NC, Kp, Np, num_layers, op_bytes, budget)
    NCp = _round_up(NC, m_blk)

    # v7x megacore: a 1-step grid leaves the second TensorCore idle; split rows.
    if (Np // n_blk) * (NCp // m_blk) < 2 and NC > 16:
        m_blk = _round_up(-(-NC // 2), 16)
        NCp = _round_up(NC, m_blk)

    base, deltas = build_base_and_delta_operators(
        Hi, Wi, Ho, Wo, kernel_size, stddev, num_layers)
    ops = _device_operators(base, deltas, weights, compute_dtype)  # (L+1,K,Nd)

    if Kdim == Kp and Ndim == Np:
        kt = ops                                          # aligned: no pad copy
    else:
        kt = jnp.zeros((num_layers + 1, Kp, Np), compute_dtype
                       ).at[:, :Kdim, :Ndim].set(ops)

    x_flat = jnp.reshape(x, (NC, Kdim)).astype(compute_dtype)
    if NC == NCp and Kdim == Kp:
        x_pad = x_flat                                    # skip HBM pad round-trip
    else:
        x_pad = jnp.zeros((NCp, Kp), compute_dtype).at[:NC, :Kdim].set(x_flat)

    b = jnp.asarray(biases, jnp.float32).reshape(num_layers)

    # Grid: lane tiles outer, row blocks inner -> the operator block is fetched
    # once per lane tile (constant over the inner axis) while x streams.
    grid = (Np // n_blk, NCp // m_blk)

    cost = pl.CostEstimate(
        flops=2 * NCp * Kp * Np * (num_layers + 1),
        transcendentals=NCp * Np * num_layers,
        bytes_accessed=(grid[0] * NCp * Kp * op_bytes
                        + (num_layers + 1) * Kp * Np * op_bytes
                        + NCp * Np * 4),
    )

    out = pl.pallas_call(
        functools.partial(muller_kron_kernel, num_layers=num_layers),
        out_shape=jax.ShapeDtypeStruct((NCp, Np), jnp.float32),
        grid=grid,
        in_specs=[
            pl.BlockSpec(memory_space=pltpu.MemorySpace.SMEM),           # biases
            pl.BlockSpec((num_layers + 1, Kp, n_blk),
                         lambda j, i: (0, 0, j)),                        # operators
            pl.BlockSpec((m_blk, Kp), lambda j, i: (i, 0)),              # plane rows
        ],
        out_specs=pl.BlockSpec((m_blk, n_blk), lambda j, i: (i, j)),
        compiler_params=pltpu.CompilerParams(
            dimension_semantics=("parallel", "parallel"),
            vmem_limit_bytes=int(min(budget,
                                     max(2 * need, 32 * 1024 * 1024)))),
        cost_estimate=cost,
    )(b, kt, x_pad)

    return out[:NC, :Ndim].reshape(N, C, Ho, Wo)


# ----------------------------------------------------------------------------
# References
# ----------------------------------------------------------------------------
def muller_resizer_ref_fused(x, target_size, weights, biases, *, kernel_size=5,
                             stddev=1.0, num_layers=2,
                             compute_dtype=jnp.bfloat16):
    """Plain-XLA version of exactly the fused math the Pallas kernel runs."""
    N, C, Hi, Wi = x.shape
    Ho, Wo = target_size
    base, deltas = build_base_and_delta_operators(
        Hi, Wi, Ho, Wo, kernel_size, stddev, num_layers)
    ops = _device_operators(base, deltas, weights, compute_dtype)
    xf = jnp.reshape(x, (N * C, Hi * Wi)).astype(compute_dtype)
    b = jnp.asarray(biases, jnp.float32)
    net = jnp.dot(xf, ops[0], preferred_element_type=jnp.float32)
    for l in range(num_layers):
        net = net + jnp.tanh(
            jnp.dot(xf, ops[l + 1], preferred_element_type=jnp.float32) + b[l])
    return net.reshape(N, C, Ho, Wo)


def muller_resizer_ref_f32(x, target_size, weights, biases, *, kernel_size=5,
                           stddev=1.0, num_layers=2):
    """Unfused full-f32 reference mirroring the PyTorch forward exactly."""
    N, C, Hi, Wi = x.shape
    Ho, Wo = target_size
    A_h = jnp.asarray(bicubic_matrix(Hi, Ho), jnp.float32)
    A_w = jnp.asarray(bicubic_matrix(Wi, Wo), jnp.float32)
    B_h = jnp.asarray(blur_matrix(Hi, kernel_size, stddev), jnp.float32)
    B_w = jnp.asarray(blur_matrix(Wi, kernel_size, stddev), jnp.float32)

    def resize(v):
        return jnp.einsum('oi,nciw,pw->ncop', A_h, v, A_w)

    def blur(v):
        return jnp.einsum('oi,nciw,pw->ncop', B_h, v, B_w)

    w = jnp.asarray(weights, jnp.float32)
    b = jnp.asarray(biases, jnp.float32)
    xx = x.astype(jnp.float32)
    net = resize(xx)
    for l in range(num_layers):
        blurred = blur(xx)
        net = net + jnp.tanh(w[l] * resize(blurred - xx) + b[l])
        xx = blurred
    return net


if __name__ == "__main__":
    N, C, Hi, Wi = 2, 4, 16, 16          # d_in = C = 4
    Ho, Wo = 32, 32
    num_layers = 2

    key = jax.random.PRNGKey(0)
    kx, kw = jax.random.split(key)
    x = jax.random.normal(kx, (N, C, Hi, Wi), dtype=jnp.float32)

    # Deterministic parameter init mirroring nn.init.uniform_(-0.1, 0.1) / zeros_.
    weights = jax.random.uniform(kw, (num_layers,), jnp.float32,
                                 minval=-0.1, maxval=0.1)
    biases = jnp.zeros((num_layers,), jnp.float32)

    out = muller_resizer(x, (Ho, Wo), weights, biases,
                         kernel_size=5, stddev=1.0, num_layers=num_layers)
    out = jax.block_until_ready(out)

    assert out.shape == (N, C, Ho, Wo)
    assert bool(jnp.all(jnp.isfinite(out)))

    # Tight check vs an XLA reference with identical fused bf16 math
    # (validates the Pallas plumbing, modulo accumulation order).
    ref_fused = jax.block_until_ready(
        muller_resizer_ref_fused(x, (Ho, Wo), weights, biases,
                                 kernel_size=5, stddev=1.0,
                                 num_layers=num_layers))
    assert bool(jnp.allclose(out, ref_fused, rtol=1e-3, atol=1e-3)), \
        "mismatch vs fused bf16 reference"

    # Loose check vs the unfused full-f32 reference (validates the host-side
    # operator fusion / module semantics; slack covers bf16 MXU inputs).
    ref_f32 = jax.block_until_ready(
        muller_resizer_ref_f32(x, (Ho, Wo), weights, biases,
                               kernel_size=5, stddev=1.0,
                               num_layers=num_layers))
    assert bool(jnp.allclose(out, ref_f32, rtol=5e-2, atol=5e-2)), \
        "mismatch vs f32 unfused reference"

    print("KERNEL_OK")
</pallas_src>

<mosaic_0001>
module attributes {stable_mosaic.version = 11 : i64} {
  func.func @muller_kron_kernel(%arg0: i32, %arg1: i32, %arg2: memref<2xf32, #tpu.memory_space<smem>>, %arg3: memref<3x256x512xbf16, #tpu.memory_space<vmem>>, %arg4: memref<16x256xbf16, #tpu.memory_space<vmem>>, %arg5: memref<16x512xf32, #tpu.memory_space<vmem>>) attributes {dimension_semantics = [#tpu.dimension_semantics<parallel>, #tpu.dimension_semantics<parallel>], iteration_bounds = array<i64: 2, 1>, scalar_prefetch = 0 : i64, scratch_operands = 0 : i64, tpu.core_type = #tpu.core_type<tc>, window_params = [{transform_indices = @transform_0, window_bounds = array<i64: 2>}, {transform_indices = @transform_1, window_bounds = array<i64: 3, 256, 512>}, {transform_indices = @transform_2, window_bounds = array<i64: 16, 256>}, {transform_indices = @transform_3, window_bounds = array<i64: 16, 512>}]} {
    %c0 = arith.constant 0 : index
    %c0_0 = arith.constant 0 : index
    %0 = vector.load %arg4[%c0, %c0_0] : memref<16x256xbf16, #tpu.memory_space<vmem>>, vector<16x256xbf16>
    %c0_1 = arith.constant 0 : index
    %c0_2 = arith.constant 0 : index
    %c0_3 = arith.constant 0 : index
    %1 = vector.load %arg3[%c0_1, %c0_2, %c0_3] : memref<3x256x512xbf16, #tpu.memory_space<vmem>>, vector<1x256x512xbf16>
    %2 = vector.shape_cast %1 : vector<1x256x512xbf16> to vector<256x512xbf16>
    %cst = arith.constant dense<0.000000e+00> : vector<16x512xf32>
    %3 = tpu.matmul %0, %2, %cst {dimension_numbers = #tpu.dot_dimension_numbers<[1], [0], [0], [1], [0, 0, 1, 1], [], []>} : vector<16x256xbf16>, vector<256x512xbf16>, vector<16x512xf32> -> vector<16x512xf32>
    %c1 = arith.constant 1 : index
    %c0_4 = arith.constant 0 : index
    %c0_5 = arith.constant 0 : index
    %4 = vector.load %arg3[%c1, %c0_4, %c0_5] : memref<3x256x512xbf16, #tpu.memory_space<vmem>>, vector<1x256x512xbf16>
    %5 = vector.shape_cast %4 : vector<1x256x512xbf16> to vector<256x512xbf16>
    %cst_6 = arith.constant dense<0.000000e+00> : vector<16x512xf32>
    %6 = tpu.matmul %0, %5, %cst_6 {dimension_numbers = #tpu.dot_dimension_numbers<[1], [0], [0], [1], [0, 0, 1, 1], [], []>} : vector<16x256xbf16>, vector<256x512xbf16>, vector<16x512xf32> -> vector<16x512xf32>
    %c0_7 = arith.constant 0 : index
    %7 = memref.load %arg2[%c0_7] : memref<2xf32, #tpu.memory_space<smem>>
    %8 = vector.broadcast %7 : f32 to vector<16x512xf32>
    %9 = arith.addf %6, %8 : vector<16x512xf32>
    %10 = math.tanh %9 : vector<16x512xf32>
    %11 = arith.addf %3, %10 : vector<16x512xf32>
    %c2 = arith.constant 2 : index
    %c0_8 = arith.constant 0 : index
    %c0_9 = arith.constant 0 : index
    %12 = vector.load %arg3[%c2, %c0_8, %c0_9] : memref<3x256x512xbf16, #tpu.memory_space<vmem>>, vector<1x256x512xbf16>
    %13 = vector.shape_cast %12 : vector<1x256x512xbf16> to vector<256x512xbf16>
    %cst_10 = arith.constant dense<0.000000e+00> : vector<16x512xf32>
    %14 = tpu.matmul %0, %13, %cst_10 {dimension_numbers = #tpu.dot_dimension_numbers<[1], [0], [0], [1], [0, 0, 1, 1], [], []>} : vector<16x256xbf16>, vector<256x512xbf16>, vector<16x512xf32> -> vector<16x512xf32>
    %c1_11 = arith.constant 1 : index
    %15 = memref.load %arg2[%c1_11] : memref<2xf32, #tpu.memory_space<smem>>
    %16 = vector.broadcast %15 : f32 to vector<16x512xf32>
    %17 = arith.addf %14, %16 : vector<16x512xf32>
    %18 = math.tanh %17 : vector<16x512xf32>
    %19 = arith.addf %11, %18 : vector<16x512xf32>
    %c0_12 = arith.constant 0 : index
    %c0_13 = arith.constant 0 : index
    %20 = vector.load %arg5[%c0_12, %c0_13] : memref<16x512xf32, #tpu.memory_space<vmem>>, vector<16x512xf32>
    tpu.vector_store %arg5[%c0_12, %c0_13], %19 {strides = array<i32>} : memref<16x512xf32, #tpu.memory_space<vmem>>, vector<16x512xf32>,
    return
  }
  func.func @transform_0(%arg0: i32, %arg1: i32) -> i32 {
    %c0_i32 = arith.constant 0 : i32
    %c0_i32_0 = arith.constant 0 : i32
    return %c0_i32 : i32
  }
  func.func @transform_1(%arg0: i32, %arg1: i32) -> (i32, i32, i32) {
    %c0_i32 = arith.constant 0 : i32
    %c0_i32_0 = arith.constant 0 : i32
    %c0_i32_1 = arith.constant 0 : i32
    return %c0_i32, %c0_i32_0, %arg0 : i32, i32, i32
  }
  func.func @transform_2(%arg0: i32, %arg1: i32) -> (i32, i32) {
    %c0_i32 = arith.constant 0 : i32
    %c0_i32_0 = arith.constant 0 : i32
    return %arg1, %c0_i32 : i32, i32
  }
  func.func @transform_3(%arg0: i32, %arg1: i32) -> (i32, i32) {
    %c0_i32 = arith.constant 0 : i32
    return %arg1, %arg0 : i32, i32
  }
}

</mosaic_0001>

<llo_original>
// kernel: tpu_custom_call.1
$region0: #{tpu_custom_call.1}
  #allocation0 [shape = 'u32[]', space=smem, size = 0x4, offset = 0x4, fixed_abs, tag = 'smem constant byte address 0x4 - core index']
  #allocation1 [shape = 'u32[72,128]{1,0:T(1,128)}', space=vmem, size = 0x9000, scoped, tag = 'internal scratch']
  %s0 = inlined_call_operand.hbm [shape: f32[2], index: 0, kind: input, shape index: {}]
  %s1 = inlined_call_operand.hbm [shape: bf16[3,256,1024], index: 1, kind: input, shape index: {}]
  %s2 = inlined_call_operand.hbm [shape: bf16[16,256], index: 2, kind: input, shape index: {}]
  %s3 = inlined_call_operand.hbm [shape: f32[16,1024], index: 3, kind: output, shape index: {}]
  %s4 = sld [smem:[#allocation0]]
  $region57: #{tpu_custom_call.1} parent=0
    _
  %s6 = ssub.s32 1, %s4
  %s7 = scalar_select 0, %s6, %s4
  $region1: #{tpu_custom_call.1} parent=0
    #allocation2 [shape = 'u8[512]{0}', space=smem, size = 0x200, scoped, tag = 'input window, operand 0, single buffered']
    #allocation3 [shape = 's32[2]{0}', space=sflag, size = 0x8, scoped, tag = 'scoped memory for tpu_custom_call.1']
    #allocation4 [shape = 's32[2]{0}', space=sflag, size = 0x8, scoped, tag = 'scoped memory for tpu_custom_call.1']
    #allocation5 [shape = 's32[2]{0}', space=sflag, size = 0x8, scoped, tag = 'scoped memory for tpu_custom_call.1']
    #allocation6 [shape = 'u8[1572864]{0}', space=vmem, size = 0x180000, scoped, tag = 'input window, operand 1']
    #allocation7 [shape = 'u8[8192]{0}', space=vmem, size = 0x2000, scoped, tag = 'input window, operand 2, single buffered']
    #allocation8 [shape = 's32[1]{0}', space=sflag, size = 0x4, scoped, tag = 'scoped memory for tpu_custom_call.1']
    #allocation9 [shape = 'u8[65536]{0}', space=vmem, size = 0x10000, scoped, tag = 'output window, operand 0']
    %8 = vsyncpa [#allocation5], 0
    %9 = vsyncpa [#allocation3], 0
    %s10 = scalar_lea.sflag [#allocation3], 1
    %11 = vsyncpa %s10, 0
    %12 = vsyncpa [#allocation8], 0
    %13 = vsyncpa [#allocation4], 0
    %s14 = scalar_lea.sflag [#allocation4], 1
    %15 = vsyncpa %s14, 0
    loop: start=0, step=1, limit=4
    $region2: #{tpu_custom_call.1} parent=1 // loop_pre_header
      _
    $region3: #{tpu_custom_call.1} parent=1 // loop_header
      %s17 = sphi 0, %s21
      %p18 = scmp.ge.s32.totalorder %s17, 4
      %s24 = sphi 0, %s36
      %s25 = sphi 0, %s32
      %s26 = sphi 0, %s24
      %s27 = sphi 0, %s25
      %s28 = sphi 0, %s26
      %s29 = sphi 0, %s27
      %s37 = sphi 0, %s37
      %s39 = sphi 0, %s37
      %s40 = sphi 0, %s39
      %s54 = sphi 0, %s40
      %s60 = sphi 0, %s62
      %s63 = sphi 0, %s60
      %s64 = sphi 0, %s63
      %s80 = sphi 0, %s64
      %s86 = sphi 0, %s88
      %s89 = sphi 0, %s86
      %s90 = sphi 0, %s89
      %s106 = sphi 0, %s90
      %s114 = sphi 0, %s116
      %s117 = sphi 0, %s114
      %s118 = sphi 0, %s117
      %s134 = sphi 0, %s118
    $region4: #{tpu_custom_call.1} parent=1 // loop_header_branch
      %20 = sbr.rel (%p18) target = $region8
    $region5: #{tpu_custom_call.1} parent=1 // loop_body
      %s22 = ssub.s32 %s17, 1
      %s23 = ssub.s32 %s17, 2
      %s30 = sadd.s32 1, %s25
      %p31 = scmp.ge.s32.totalorder %s30, 1
      %s32 = scalar_select %p31, 0, %s30
      %s33 = sadd.s32 1, %s24
      %s34 = scalar_select %p31, %s33, %s24
      %p35 = scmp.ge.s32.totalorder %s34, 2
      %s36 = scalar_select %p35, 0, %s34
      %s38 = sadd.s32 %s37, 1
      %p41 = scmp.eq.s32.totalorder %s17, 1
      %p42 = scmp.ne.s32.totalorder %s37, %s39
      %p43 = scmp.eq.s32.totalorder %s17, 0
      %p44 = por %p42, %p43
      %p45 = scmp.ne.s32.totalorder %s37, %s39
      %p46 = scmp.eq.s32.totalorder %s22, 1
      %p47 = por %p45, %p46
      %p48 = scmp.ne.s32.totalorder %s39, %s40
      %p49 = scmp.eq.s32.totalorder %s22, 0
      %p50 = por %p48, %p49
      %p51 = scmp.ne.s32.totalorder %s39, %s40
      %p52 = scmp.eq.s32.totalorder %s23, 1
      %p53 = por %p51, %p52
      %p55 = scmp.ne.s32.totalorder %s40, %s54
      %p56 = scmp.eq.s32.totalorder %s23, 0
      %p57 = por %p55, %p56
      %s58 = ssub.s32 %s24, %s36
      %p59 = scmp.eq.s32.totalorder %s58, 0
      %s61 = sadd.s32 %s60, 1
      %s62 = scalar_select %p59, %s60, %s61
      %p65 = pneg %p59
      %p66 = scmp.eq.s32.totalorder %s17, 1
      %p67 = por %p65, %p66
      %p68 = scmp.ne.s32.totalorder %s60, %s63
      %p69 = scmp.eq.s32.totalorder %s17, 0
      %p70 = por %p68, %p69
      %p71 = scmp.ne.s32.totalorder %s60, %s63
      %p72 = scmp.eq.s32.totalorder %s22, 1
      %p73 = por %p71, %p72
      %p74 = scmp.ne.s32.totalorder %s63, %s64
      %p75 = scmp.eq.s32.totalorder %s22, 0
      %p76 = por %p74, %p75
      %p77 = scmp.ne.s32.totalorder %s63, %s64
      %p78 = scmp.eq.s32.totalorder %s23, 1
      %p79 = por %p77, %p78
      %p81 = scmp.ne.s32.totalorder %s64, %s80
      %p82 = scmp.eq.s32.totalorder %s23, 0
      %p83 = por %p81, %p82
      %s84 = ssub.s32 %s25, %s32
      %p85 = scmp.eq.s32.totalorder %s84, 0
      %s87 = sadd.s32 %s86, 1
      %s88 = scalar_select %p85, %s86, %s87
      %p91 = pneg %p85
      %p92 = scmp.eq.s32.totalorder %s17, 1
      %p93 = por %p91, %p92
      %p94 = scmp.ne.s32.totalorder %s86, %s89
      %p95 = scmp.eq.s32.totalorder %s17, 0
      %p96 = por %p94, %p95
      %p97 = scmp.ne.s32.totalorder %s86, %s89
      %p98 = scmp.eq.s32.totalorder %s22, 1
      %p99 = por %p97, %p98
      %p100 = scmp.ne.s32.totalorder %s89, %s90
      %p101 = scmp.eq.s32.totalorder %s22, 0
      %p102 = por %p100, %p101
      %p103 = scmp.ne.s32.totalorder %s89, %s90
      %p104 = scmp.eq.s32.totalorder %s23, 1
      %p105 = por %p103, %p104
      %p107 = scmp.ne.s32.totalorder %s90, %s106
      %p108 = scmp.eq.s32.totalorder %s23, 0
      %p109 = por %p107, %p108
      %s110 = ssub.s32 %s25, %s32
      %s111 = ssub.s32 %s24, %s36
      %s112 = sor.u32 %s110, %s111
      %p113 = scmp.eq.s32.totalorder %s112, 0
      %s115 = sadd.s32 %s114, 1
      %s116 = scalar_select %p113, %s114, %s115
      %p119 = pneg %p113
      %p120 = scmp.eq.s32.totalorder %s17, 1
      %p121 = por %p119, %p120
      %p122 = scmp.ne.s32.totalorder %s114, %s117
      %p123 = scmp.eq.s32.totalorder %s17, 0
      %p124 = por %p122, %p123
      %p125 = scmp.ne.s32.totalorder %s114, %s117
      %p126 = scmp.eq.s32.totalorder %s22, 1
      %p127 = por %p125, %p126
      %p128 = scmp.ne.s32.totalorder %s117, %s118
      %p129 = scmp.eq.s32.totalorder %s22, 0
      %p130 = por %p128, %p129
      %p131 = scmp.ne.s32.totalorder %s117, %s118
      %p132 = scmp.eq.s32.totalorder %s23, 1
      %p133 = por %p131, %p132
      %p135 = scmp.ne.s32.totalorder %s118, %s134
      %p136 = scmp.eq.s32.totalorder %s23, 0
      %p137 = por %p135, %p136
      %p138 = scmp.le.s32.totalorder 1, %s17
      %p139 = scmp.lt.s32.totalorder %s17, 3
      %p140 = pnand %p138, %p139
      %p141 = pneg %p140
      // Predicated region
      $region9: #{tpu_custom_call.1} parent=5 // pred_check
        _
      $region10: #{tpu_custom_call.1} parent=5 // pred_check_branch
        %143 = sbr.rel (%p140) target = $region12
      $region11: #{tpu_custom_call.1} parent=5 // pred_region
        %s144 = ssub.s32 %s17, 1
        // Predicated region
        $region13: #{tpu_custom_call.1} parent=11 // pred_check
          %p145 = pneg %p50
        $region14: #{tpu_custom_call.1} parent=11 // pred_check_branch
          %147 = sbr.rel (%p145) target = $region16
        $region15: #{tpu_custom_call.1} parent=11 // pred_region
          %149 = vsyncadd [#allocation5], 0
          %s151 = sshll.u32 %s0, 4
          %s152 = int_to_ptr.hbm [resolvable:$true] %s151
          %154 = dma.hbm_to_smem %s152, 16, [#allocation2], [#allocation5]
        $region16: #{tpu_custom_call.1} parent=11 // pred_fallthru
          _
        // Predicated region
        $region17: #{tpu_custom_call.1} parent=11 // pred_check
          %p155 = pneg %p102
        $region18: #{tpu_custom_call.1} parent=11 // pred_check_branch
          %157 = sbr.rel (%p155) target = $region20
        $region19: #{tpu_custom_call.1} parent=11 // pred_region
          %s158 = smul.u32 2, %s27
          %160 = vsyncadd [#allocation8], 0
          %s161 = smul.addr %s158, 2
          %s162 = smul.addr %s161, 4
          %s163 = scalar_lea.hbm %s2, %s162
          %s164 = sshll.u32 %s163, 4
          %s165 = int_to_ptr.hbm [resolvable:$true] %s164
          %s166 = sshll.u32 [#allocation7], 4
          %s167 = int_to_ptr.vmem [resolvable:$true] %s166
          %172 = dma.hbm_to_vmem [thread:$0]  %s165, 256, %s167, [#allocation8], 128, 128, 8
        $region20: #{tpu_custom_call.1} parent=11 // pred_fallthru
          _
      $region12: #{tpu_custom_call.1} parent=5 // pred_fallthru
        _
      %p173 = scmp.lt.s32.totalorder %s17, 2
      // Predicated region
      $region21: #{tpu_custom_call.1} parent=5 // pred_check
        %p174 = pneg %p173
      $region22: #{tpu_custom_call.1} parent=5 // pred_check_branch
        %176 = sbr.rel (%p174) target = $region24
      $region23: #{tpu_custom_call.1} parent=5 // pred_region
        // Predicated region
        $region25: #{tpu_custom_call.1} parent=23 // pred_check
          %p177 = pneg %p70
        $region26: #{tpu_custom_call.1} parent=23 // pred_check_branch
          %179 = sbr.rel (%p177) target = $region28
        $region27: #{tpu_custom_call.1} parent=23 // pred_region
          %s180 = sand.u32 %s60, 1
          %s181 = scalar_lea.sflag [#allocation3], %s180
          %s182 = sand.u32 %s60, 1
          %s183 = smul.addr %s182, 1536
          %s184 = scalar_lea.vmem [#allocation6], %s183
          %s185 = smul.u32 4, %s24
          %187 = vsyncadd %s181, 0
          %s188 = smul.addr %s185, 4
          %s189 = scalar_lea.hbm %s1, %s188
          %s190 = sshll.u32 %s189, 4
          %s191 = int_to_ptr.hbm [resolvable:$true] %s190
          %s192 = sshll.u32 %s184, 4
          %s193 = int_to_ptr.vmem [resolvable:$true] %s192
          %198 = dma.hbm_to_vmem [thread:$0]  %s191, 24576, %s193, %s181, 512, 256, 16
        $region28: #{tpu_custom_call.1} parent=23 // pred_fallthru
          _
      $region24: #{tpu_custom_call.1} parent=5 // pred_fallthru
        _
      %p199 = scmp.le.s32.totalorder 1, %s17
      %p200 = scmp.lt.s32.totalorder %s17, 3
      %p201 = pnand %p199, %p200
      %p202 = pneg %p201
      // Predicated region
      $region29: #{tpu_custom_call.1} parent=5 // pred_check
        _
      $region30: #{tpu_custom_call.1} parent=5 // pred_check_branch
        %204 = sbr.rel (%p201) target = $region32
      $region31: #{tpu_custom_call.1} parent=5 // pred_region
        %s205 = ssub.s32 %s17, 1
        // Predicated region
        $region33: #{tpu_custom_call.1} parent=31 // pred_check
          %p206 = pneg %p50
        $region34: #{tpu_custom_call.1} parent=31 // pred_check_branch
          %208 = sbr.rel (%p206) target = $region36
        $region35: #{tpu_custom_call.1} parent=31 // pred_region
          %210 = dma.done [#allocation5], 16
        $region36: #{tpu_custom_call.1} parent=31 // pred_fallthru
          _
        %s211 = sand.u32 %s63, 1
        %s212 = scalar_lea.sflag [#allocation3], %s211
        %s213 = sand.u32 %s63, 1
        %s214 = smul.addr %s213, 1536
        %s215 = scalar_lea.vmem [#allocation6], %s214
        // Predicated region
        $region37: #{tpu_custom_call.1} parent=31 // pred_check
          %p216 = pneg %p76
        $region38: #{tpu_custom_call.1} parent=31 // pred_check_branch
          %218 = sbr.rel (%p216) target = $region40
        $region39: #{tpu_custom_call.1} parent=31 // pred_region
          %220 = dma.done %s212, 24576
        $region40: #{tpu_custom_call.1} parent=31 // pred_fallthru
          _
        // Predicated region
        $region41: #{tpu_custom_call.1} parent=31 // pred_check
          %p221 = pneg %p102
        $region42: #{tpu_custom_call.1} parent=31 // pred_check_branch
          %223 = sbr.rel (%p221) target = $region44
        $region43: #{tpu_custom_call.1} parent=31 // pred_region
          %225 = dma.done [#allocation8], 256
        $region44: #{tpu_custom_call.1} parent=31 // pred_fallthru
          _
        %226 = sfence
        %p227 = pneg %p50
        %p228 = pneg %p47
        %s229 = sand.u32 %s63, 1
        %s230 = scalar_lea.sflag [#allocation3], %s229
        %s231 = sand.u32 %s63, 1
        %s232 = smul.addr %s231, 1536
        %s233 = scalar_lea.vmem [#allocation6], %s232
        %p234 = pneg %p76
        %p235 = pneg %p73
        %p236 = pneg %p102
        %p237 = pneg %p99
        %p238 = pneg %p130
        %p239 = pneg %p127
        %s240 = sand.u32 %s117, 1
        %s241 = scalar_lea.sflag [#allocation4], %s240
        %s242 = sand.u32 %s117, 1
        %s243 = smul.addr %s242, 64
        %s244 = scalar_lea.vmem [#allocation9], %s243
        %s245 = smul.u32 4, %s26
        %s246 = smul.u32 2, %s27
        %s247 = smul.u32 2, %s27
        %s248 = smul.u32 4, %s26
        %v249 = vld [vmem:[#allocation7] sm:$0xff]
        %v250 = vld [vmem:[#allocation7 + $0x8] sm:$0xff]
        %v251 = vld [vmem:[%s215] sm:$0xff]
        %v252 = vld [vmem:[%s215 + $0x8] sm:$0xff]
        %v253 = vld [vmem:[%s215 + $0x10] sm:$0xff]
        %v254 = vld [vmem:[%s215 + $0x18] sm:$0xff]
        %v255 = vld [vmem:[%s215 + $0x20] sm:$0xff]
        %v256 = vld [vmem:[%s215 + $0x28] sm:$0xff]
        %v257 = vld [vmem:[%s215 + $0x30] sm:$0xff]
        %v258 = vld [vmem:[%s215 + $0x38] sm:$0xff]
        %v259 = vld [vmem:[%s215 + $0x40] sm:$0xff]
        %v260 = vld [vmem:[%s215 + $0x48] sm:$0xff]
        %v261 = vld [vmem:[%s215 + $0x50] sm:$0xff]
        %v262 = vld [vmem:[%s215 + $0x58] sm:$0xff]
        %v263 = vld [vmem:[%s215 + $0x60] sm:$0xff]
        %v264 = vld [vmem:[%s215 + $0x68] sm:$0xff]
        %v265 = vld [vmem:[%s215 + $0x70] sm:$0xff]
        %v266 = vld [vmem:[%s215 + $0x78] sm:$0xff]
        %v267 = vld [vmem:[%s215 + $0x80] sm:$0xff]
        %v268 = vld [vmem:[%s215 + $0x88] sm:$0xff]
        %v269 = vld [vmem:[%s215 + $0x90] sm:$0xff]
        %v270 = vld [vmem:[%s215 + $0x98] sm:$0xff]
        %v271 = vld [vmem:[%s215 + $0xa0] sm:$0xff]
        %v272 = vld [vmem:[%s215 + $0xa8] sm:$0xff]
        %v273 = vld [vmem:[%s215 + $0xb0] sm:$0xff]
        %v274 = vld [vmem:[%s215 + $0xb8] sm:$0xff]
        %v275 = vld [vmem:[%s215 + $0xc0] sm:$0xff]
        %v276 = vld [vmem:[%s215 + $0xc8] sm:$0xff]
        %v277 = vld [vmem:[%s215 + $0xd0] sm:$0xff]
        %v278 = vld [vmem:[%s215 + $0xd8] sm:$0xff]
        %v279 = vld [vmem:[%s215 + $0xe0] sm:$0xff]
        %v280 = vld [vmem:[%s215 + $0xe8] sm:$0xff]
        %v281 = vld [vmem:[%s215 + $0xf0] sm:$0xff]
        %v282 = vld [vmem:[%s215 + $0xf8] sm:$0xff]
        %v283 = vld [vmem:[%s215 + $0x100] sm:$0xff]
        %v284 = vld [vmem:[%s215 + $0x108] sm:$0xff]
        %v285 = vld [vmem:[%s215 + $0x110] sm:$0xff]
        %v286 = vld [vmem:[%s215 + $0x118] sm:$0xff]
        %v287 = vld [vmem:[%s215 + $0x120] sm:$0xff]
        %v288 = vld [vmem:[%s215 + $0x128] sm:$0xff]
        %v289 = vld [vmem:[%s215 + $0x130] sm:$0xff]
        %v290 = vld [vmem:[%s215 + $0x138] sm:$0xff]
        %v291 = vld [vmem:[%s215 + $0x140] sm:$0xff]
        %v292 = vld [vmem:[%s215 + $0x148] sm:$0xff]
        %v293 = vld [vmem:[%s215 + $0x150] sm:$0xff]
        %v294 = vld [vmem:[%s215 + $0x158] sm:$0xff]
        %v295 = vld [vmem:[%s215 + $0x160] sm:$0xff]
        %v296 = vld [vmem:[%s215 + $0x168] sm:$0xff]
        %v297 = vld [vmem:[%s215 + $0x170] sm:$0xff]
        %v298 = vld [vmem:[%s215 + $0x178] sm:$0xff]
        %v299 = vld [vmem:[%s215 + $0x180] sm:$0xff]
        %v300 = vld [vmem:[%s215 + $0x188] sm:$0xff]
        %v301 = vld [vmem:[%s215 + $0x190] sm:$0xff]
        %v302 = vld [vmem:[%s215 + $0x198] sm:$0xff]
        %v303 = vld [vmem:[%s215 + $0x1a0] sm:$0xff]
        %v304 = vld [vmem:[%s215 + $0x1a8] sm:$0xff]
        %v305 = vld [vmem:[%s215 + $0x1b0] sm:$0xff]
        %v306 = vld [vmem:[%s215 + $0x1b8] sm:$0xff]
        %v307 = vld [vmem:[%s215 + $0x1c0] sm:$0xff]
        %v308 = vld [vmem:[%s215 + $0x1c8] sm:$0xff]
        %v309 = vld [vmem:[%s215 + $0x1d0] sm:$0xff]
        %v310 = vld [vmem:[%s215 + $0x1d8] sm:$0xff]
        %v311 = vld [vmem:[%s215 + $0x1e0] sm:$0xff]
        %v312 = vld [vmem:[%s215 + $0x1e8] sm:$0xff]
        %v313 = vld [vmem:[%s215 + $0x1f0] sm:$0xff]
        %v314 = vld [vmem:[%s215 + $0x1f8] sm:$0xff]
        %s315 = scalar_lea.vmem %s215, 512 [#allocation6]
        %v316 = vld [vmem:[%s315] sm:$0xff]
        %v317 = vld [vmem:[%s315 + $0x8] sm:$0xff]
        %v318 = vld [vmem:[%s315 + $0x10] sm:$0xff]
        %v319 = vld [vmem:[%s315 + $0x18] sm:$0xff]
        %v320 = vld [vmem:[%s315 + $0x20] sm:$0xff]
        %v321 = vld [vmem:[%s315 + $0x28] sm:$0xff]
        %v322 = vld [vmem:[%s315 + $0x30] sm:$0xff]
        %v323 = vld [vmem:[%s315 + $0x38] sm:$0xff]
        %v324 = vld [vmem:[%s315 + $0x40] sm:$0xff]
        %v325 = vld [vmem:[%s315 + $0x48] sm:$0xff]
        %v326 = vld [vmem:[%s315 + $0x50] sm:$0xff]
        %v327 = vld [vmem:[%s315 + $0x58] sm:$0xff]
        %v328 = vld [vmem:[%s315 + $0x60] sm:$0xff]
        %v329 = vld [vmem:[%s315 + $0x68] sm:$0xff]
        %v330 = vld [vmem:[%s315 + $0x70] sm:$0xff]
        %v331 = vld [vmem:[%s315 + $0x78] sm:$0xff]
        %v332 = vld [vmem:[%s315 + $0x80] sm:$0xff]
        %v333 = vld [vmem:[%s315 + $0x88] sm:$0xff]
        %v334 = vld [vmem:[%s315 + $0x90] sm:$0xff]
        %v335 = vld [vmem:[%s315 + $0x98] sm:$0xff]
        %v336 = vld [vmem:[%s315 + $0xa0] sm:$0xff]
        %v337 = vld [vmem:[%s315 + $0xa8] sm:$0xff]
        %v338 = vld [vmem:[%s315 + $0xb0] sm:$0xff]
        %v339 = vld [vmem:[%s315 + $0xb8] sm:$0xff]
        %v340 = vld [vmem:[%s315 + $0xc0] sm:$0xff]
        %v341 = vld [vmem:[%s315 + $0xc8] sm:$0xff]
        %v342 = vld [vmem:[%s315 + $0xd0] sm:$0xff]
        %v343 = vld [vmem:[%s315 + $0xd8] sm:$0xff]
        %v344 = vld [vmem:[%s315 + $0xe0] sm:$0xff]
        %v345 = vld [vmem:[%s315 + $0xe8] sm:$0xff]
        %v346 = vld [vmem:[%s315 + $0xf0] sm:$0xff]
        %v347 = vld [vmem:[%s315 + $0xf8] sm:$0xff]
        %v348 = vld [vmem:[%s315 + $0x100] sm:$0xff]
        %v349 = vld [vmem:[%s315 + $0x108] sm:$0xff]
        %v350 = vld [vmem:[%s315 + $0x110] sm:$0xff]
        %v351 = vld [vmem:[%s315 + $0x118] sm:$0xff]
        %v352 = vld [vmem:[%s315 + $0x120] sm:$0xff]
        %v353 = vld [vmem:[%s315 + $0x128] sm:$0xff]
        %v354 = vld [vmem:[%s315 + $0x130] sm:$0xff]
        %v355 = vld [vmem:[%s315 + $0x138] sm:$0xff]
        %v356 = vld [vmem:[%s315 + $0x140] sm:$0xff]
        %v357 = vld [vmem:[%s315 + $0x148] sm:$0xff]
        %v358 = vld [vmem:[%s315 + $0x150] sm:$0xff]
        %v359 = vld [vmem:[%s315 + $0x158] sm:$0xff]
        %v360 = vld [vmem:[%s315 + $0x160] sm:$0xff]
        %v361 = vld [vmem:[%s315 + $0x168] sm:$0xff]
        %v362 = vld [vmem:[%s315 + $0x170] sm:$0xff]
        %v363 = vld [vmem:[%s315 + $0x178] sm:$0xff]
        %v364 = vld [vmem:[%s315 + $0x180] sm:$0xff]
        %v365 = vld [vmem:[%s315 + $0x188] sm:$0xff]
        %v366 = vld [vmem:[%s315 + $0x190] sm:$0xff]
        %v367 = vld [vmem:[%s315 + $0x198] sm:$0xff]
        %v368 = vld [vmem:[%s315 + $0x1a0] sm:$0xff]
        %v369 = vld [vmem:[%s315 + $0x1a8] sm:$0xff]
        %v370 = vld [vmem:[%s315 + $0x1b0] sm:$0xff]
        %v371 = vld [vmem:[%s315 + $0x1b8] sm:$0xff]
        %v372 = vld [vmem:[%s315 + $0x1c0] sm:$0xff]
        %v373 = vld [vmem:[%s315 + $0x1c8] sm:$0xff]
        %v374 = vld [vmem:[%s315 + $0x1d0] sm:$0xff]
        %v375 = vld [vmem:[%s315 + $0x1d8] sm:$0xff]
        %v376 = vld [vmem:[%s315 + $0x1e0] sm:$0xff]
        %v377 = vld [vmem:[%s315 + $0x1e8] sm:$0xff]
        %v378 = vld [vmem:[%s315 + $0x1f0] sm:$0xff]
        %v379 = vld [vmem:[%s315 + $0x1f8] sm:$0xff]
        %s380 = sld [smem:[#allocation2]]
        %v381 = vstv %s380
        %v384 = vunpack.c.l.b16 %v249
        %v385 = vunpack.c.h.b16 %v249
        %v386 = vunpack.c.l.b16 %v250
        %v387 = vunpack.c.h.b16 %v250
        %v388 = vpack.c.b16 %v386, %v384
        %v389 = vpack.c.b16 %v387, %v385
        %v456 = vunpack.c.l.b16 %v316
        %v457 = vunpack.c.h.b16 %v316
        %v458 = vunpack.c.l.b16 %v317
        %v459 = vunpack.c.h.b16 %v317
        %v460 = vunpack.c.l.b16 %v318
        %v461 = vunpack.c.h.b16 %v318
        %v462 = vunpack.c.l.b16 %v319
        %v463 = vunpack.c.h.b16 %v319
        %v464 = vunpack.c.l.b16 %v320
        %v465 = vunpack.c.h.b16 %v320
        %v466 = vunpack.c.l.b16 %v321
        %v467 = vunpack.c.h.b16 %v321
        %v468 = vunpack.c.l.b16 %v322
        %v469 = vunpack.c.h.b16 %v322
        %v470 = vunpack.c.l.b16 %v323
        %v471 = vunpack.c.h.b16 %v323
        %v472 = vunpack.c.l.b16 %v324
        %v473 = vunpack.c.h.b16 %v324
        %v474 = vunpack.c.l.b16 %v325
        %v475 = vunpack.c.h.b16 %v325
        %v476 = vunpack.c.l.b16 %v326
        %v477 = vunpack.c.h.b16 %v326
        %v478 = vunpack.c.l.b16 %v327
        %v479 = vunpack.c.h.b16 %v327
        %v480 = vunpack.c.l.b16 %v328
        %v481 = vunpack.c.h.b16 %v328
        %v482 = vunpack.c.l.b16 %v329
        %v483 = vunpack.c.h.b16 %v329
        %v484 = vunpack.c.l.b16 %v330
        %v485 = vunpack.c.h.b16 %v330
        %v486 = vunpack.c.l.b16 %v331
        %v487 = vunpack.c.h.b16 %v331
        %v488 = vunpack.c.l.b16 %v332
        %v489 = vunpack.c.h.b16 %v332
        %v490 = vunpack.c.l.b16 %v333
        %v491 = vunpack.c.h.b16 %v333
        %v492 = vunpack.c.l.b16 %v334
        %v493 = vunpack.c.h.b16 %v334
        %v494 = vunpack.c.l.b16 %v335
        %v495 = vunpack.c.h.b16 %v335
        %v496 = vunpack.c.l.b16 %v336
        %v497 = vunpack.c.h.b16 %v336
        %v498 = vunpack.c.l.b16 %v337
        %v499 = vunpack.c.h.b16 %v337
        %v500 = vunpack.c.l.b16 %v338
        %v501 = vunpack.c.h.b16 %v338
        %v502 = vunpack.c.l.b16 %v339
        %v503 = vunpack.c.h.b16 %v339
        %v504 = vunpack.c.l.b16 %v340
        %v505 = vunpack.c.h.b16 %v340
        %v506 = vunpack.c.l.b16 %v341
        %v507 = vunpack.c.h.b16 %v341
        %v508 = vunpack.c.l.b16 %v342
        %v509 = vunpack.c.h.b16 %v342
        %v510 = vunpack.c.l.b16 %v343
        %v511 = vunpack.c.h.b16 %v343
        %v512 = vunpack.c.l.b16 %v344
        %v513 = vunpack.c.h.b16 %v344
        %v514 = vunpack.c.l.b16 %v345
        %v515 = vunpack.c.h.b16 %v345
        %v516 = vunpack.c.l.b16 %v346
        %v517 = vunpack.c.h.b16 %v346
        %v518 = vunpack.c.l.b16 %v347
        %v519 = vunpack.c.h.b16 %v347
        %v520 = vunpack.c.l.b16 %v348
        %v521 = vunpack.c.h.b16 %v348
        %v522 = vunpack.c.l.b16 %v349
        %v523 = vunpack.c.h.b16 %v349
        %v524 = vunpack.c.l.b16 %v350
        %v525 = vunpack.c.h.b16 %v350
        %v526 = vunpack.c.l.b16 %v351
        %v527 = vunpack.c.h.b16 %v351
        %v528 = vunpack.c.l.b16 %v352
        %v529 = vunpack.c.h.b16 %v352
        %v530 = vunpack.c.l.b16 %v353
        %v531 = vunpack.c.h.b16 %v353
        %v532 = vunpack.c.l.b16 %v354
        %v533 = vunpack.c.h.b16 %v354
        %v534 = vunpack.c.l.b16 %v355
        %v535 = vunpack.c.h.b16 %v355
        %v536 = vunpack.c.l.b16 %v356
        %v537 = vunpack.c.h.b16 %v356
        %v538 = vunpack.c.l.b16 %v357
        %v539 = vunpack.c.h.b16 %v357
        %v540 = vunpack.c.l.b16 %v358
        %v541 = vunpack.c.h.b16 %v358
        %v542 = vunpack.c.l.b16 %v359
        %v543 = vunpack.c.h.b16 %v359
        %v544 = vunpack.c.l.b16 %v360
        %v545 = vunpack.c.h.b16 %v360
        %v546 = vunpack.c.l.b16 %v361
        %v547 = vunpack.c.h.b16 %v361
        %v548 = vunpack.c.l.b16 %v362
        %v549 = vunpack.c.h.b16 %v362
        %v550 = vunpack.c.l.b16 %v363
        %v551 = vunpack.c.h.b16 %v363
        %v552 = vunpack.c.l.b16 %v364
        %v553 = vunpack.c.h.b16 %v364
        %v554 = vunpack.c.l.b16 %v365
        %v555 = vunpack.c.h.b16 %v365
        %v556 = vunpack.c.l.b16 %v366
        %v557 = vunpack.c.h.b16 %v366
        %v558 = vunpack.c.l.b16 %v367
        %v559 = vunpack.c.h.b16 %v367
        %v560 = vunpack.c.l.b16 %v368
        %v561 = vunpack.c.h.b16 %v368
        %v562 = vunpack.c.l.b16 %v369
        %v563 = vunpack.c.h.b16 %v369
        %v564 = vunpack.c.l.b16 %v370
        %v565 = vunpack.c.h.b16 %v370
        %v566 = vunpack.c.l.b16 %v371
        %v567 = vunpack.c.h.b16 %v371
        %v568 = vunpack.c.l.b16 %v372
        %v569 = vunpack.c.h.b16 %v372
        %v570 = vunpack.c.l.b16 %v373
        %v571 = vunpack.c.h.b16 %v373
        %v572 = vunpack.c.l.b16 %v374
        %v573 = vunpack.c.h.b16 %v374
        %v574 = vunpack.c.l.b16 %v375
        %v575 = vunpack.c.h.b16 %v375
        %v576 = vunpack.c.l.b16 %v376
        %v577 = vunpack.c.h.b16 %v376
        %v578 = vunpack.c.l.b16 %v377
        %v579 = vunpack.c.h.b16 %v377
        %v580 = vunpack.c.l.b16 %v378
        %v581 = vunpack.c.h.b16 %v378
        %v582 = vunpack.c.l.b16 %v379
        %v583 = vunpack.c.h.b16 %v379
        %v584 = vpack.c.b16 %v460, %v456
        %v585 = vpack.c.b16 %v461, %v457
        %v586 = vpack.c.b16 %v462, %v458
        %v587 = vpack.c.b16 %v463, %v459
        %v588 = vpack.c.b16 %v468, %v464
        %v589 = vpack.c.b16 %v469, %v465
        %v590 = vpack.c.b16 %v470, %v466
        %v591 = vpack.c.b16 %v471, %v467
        %v592 = vpack.c.b16 %v476, %v472
        %v593 = vpack.c.b16 %v477, %v473
        %v594 = vpack.c.b16 %v478, %v474
        %v595 = vpack.c.b16 %v479, %v475
        %v596 = vpack.c.b16 %v484, %v480
        %v597 = vpack.c.b16 %v485, %v481
        %v598 = vpack.c.b16 %v486, %v482
        %v599 = vpack.c.b16 %v487, %v483
        %v600 = vpack.c.b16 %v492, %v488
        %v601 = vpack.c.b16 %v493, %v489
        %v602 = vpack.c.b16 %v494, %v490
        %v603 = vpack.c.b16 %v495, %v491
        %v604 = vpack.c.b16 %v500, %v496
        %v605 = vpack.c.b16 %v501, %v497
        %v606 = vpack.c.b16 %v502, %v498
        %v607 = vpack.c.b16 %v503, %v499
        %v608 = vpack.c.b16 %v508, %v504
        %v609 = vpack.c.b16 %v509, %v505
        %v610 = vpack.c.b16 %v510, %v506
        %v611 = vpack.c.b16 %v511, %v507
        %v612 = vpack.c.b16 %v516, %v512
        %v613 = vpack.c.b16 %v517, %v513
        %v614 = vpack.c.b16 %v518, %v514
        %v615 = vpack.c.b16 %v519, %v515
        %v616 = vpack.c.b16 %v524, %v520
        %v617 = vpack.c.b16 %v525, %v521
        %v618 = vpack.c.b16 %v526, %v522
        %v619 = vpack.c.b16 %v527, %v523
        %v620 = vpack.c.b16 %v532, %v528
        %v621 = vpack.c.b16 %v533, %v529
        %v622 = vpack.c.b16 %v534, %v530
        %v623 = vpack.c.b16 %v535, %v531
        %v624 = vpack.c.b16 %v540, %v536
        %v625 = vpack.c.b16 %v541, %v537
        %v626 = vpack.c.b16 %v542, %v538
        %v627 = vpack.c.b16 %v543, %v539
        %v628 = vpack.c.b16 %v548, %v544
        %v629 = vpack.c.b16 %v549, %v545
        %v630 = vpack.c.b16 %v550, %v546
        %v631 = vpack.c.b16 %v551, %v547
        %v632 = vpack.c.b16 %v556, %v552
        %v633 = vpack.c.b16 %v557, %v553
        %v634 = vpack.c.b16 %v558, %v554
        %v635 = vpack.c.b16 %v559, %v555
        %v636 = vpack.c.b16 %v564, %v560
        %v637 = vpack.c.b16 %v565, %v561
        %v638 = vpack.c.b16 %v566, %v562
        %v639 = vpack.c.b16 %v567, %v563
        %v640 = vpack.c.b16 %v572, %v568
        %v641 = vpack.c.b16 %v573, %v569
        %v642 = vpack.c.b16 %v574, %v570
        %v643 = vpack.c.b16 %v575, %v571
        %v644 = vpack.c.b16 %v580, %v576
        %v645 = vpack.c.b16 %v581, %v577
        %v646 = vpack.c.b16 %v582, %v578
        %v647 = vpack.c.b16 %v583, %v579
        %712 = vmatpush.bf16.msra.mxu0 %v612
        %713 = vmatpush.bf16.msra.mxu0 %v608
        %714 = vmatpush.bf16.msra.mxu0 %v604
        %715 = vmatpush.bf16.msra.mxu0 %v600
        %716 = vmatpush.bf16.msra.mxu0 %v596
        %717 = vmatpush.bf16.msra.mxu0 %v592
        %718 = vmatpush.bf16.msra.mxu0 %v588
        %719 = vmatpush.bf16.msra.mxu0 %v584
        %720 = vmatmul.bf16.gmra.mxu0 %v388
        %v721 = vpop.f32.mrf.mxu0
        %v722 = vadd.f32 %v381, %v721
        %v723 = vpop.f32.mrf.mxu0
        %v724 = vadd.f32 %v381, %v723
        %725 = vdwg.mxu0
        %726 = vmatpush.bf16.msra.mxu0 %v644
        %727 = vmatpush.bf16.msra.mxu0 %v640
        %728 = vmatpush.bf16.msra.mxu0 %v636
        %729 = vmatpush.bf16.msra.mxu0 %v632
        %730 = vmatpush.bf16.msra.mxu0 %v628
        %731 = vmatpush.bf16.msra.mxu0 %v624
        %732 = vmatpush.bf16.msra.mxu0 %v620
        %733 = vmatpush.bf16.msra.mxu0 %v616
        %734 = vmatmul.bf16.gmra.mxu0 %v389
        %v735 = vpop.f32.mrf.mxu0
        %v736 = vadd.f32 %v722, %v735
        %v737 = vpop.f32.mrf.mxu0
        %v738 = vadd.f32 %v724, %v737
        %739 = vdwg.mxu0
        %740 = vmatpush.bf16.msra.mxu0 %v613
        %741 = vmatpush.bf16.msra.mxu0 %v609
        %742 = vmatpush.bf16.msra.mxu0 %v605
        %743 = vmatpush.bf16.msra.mxu0 %v601
        %744 = vmatpush.bf16.msra.mxu0 %v597
        %745 = vmatpush.bf16.msra.mxu0 %v593
        %746 = vmatpush.bf16.msra.mxu0 %v589
        %747 = vmatpush.bf16.msra.mxu0 %v585
        %748 = vmatmul.bf16.gmra.mxu0 %v388
        %v749 = vpop.f32.mrf.mxu0
        %v750 = vadd.f32 %v381, %v749
        %v751 = vpop.f32.mrf.mxu0
        %v752 = vadd.f32 %v381, %v751
        %753 = vdwg.mxu0
        %754 = vmatpush.bf16.msra.mxu0 %v645
        %755 = vmatpush.bf16.msra.mxu0 %v641
        %756 = vmatpush.bf16.msra.mxu0 %v637
        %757 = vmatpush.bf16.msra.mxu0 %v633
        %758 = vmatpush.bf16.msra.mxu0 %v629
        %759 = vmatpush.bf16.msra.mxu0 %v625
        %760 = vmatpush.bf16.msra.mxu0 %v621
        %761 = vmatpush.bf16.msra.mxu0 %v617
        %762 = vmatmul.bf16.gmra.mxu0 %v389
        %v763 = vpop.f32.mrf.mxu0
        %v764 = vadd.f32 %v750, %v763
        %v765 = vpop.f32.mrf.mxu0
        %v766 = vadd.f32 %v752, %v765
        %767 = vdwg.mxu0
        %768 = vmatpush.bf16.msra.mxu0 %v614
        %769 = vmatpush.bf16.msra.mxu0 %v610
        %770 = vmatpush.bf16.msra.mxu0 %v606
        %771 = vmatpush.bf16.msra.mxu0 %v602
        %772 = vmatpush.bf16.msra.mxu0 %v598
        %773 = vmatpush.bf16.msra.mxu0 %v594
        %774 = vmatpush.bf16.msra.mxu0 %v590
        %775 = vmatpush.bf16.msra.mxu0 %v586
        %776 = vmatmul.bf16.gmra.mxu0 %v388
        %v777 = vpop.f32.mrf.mxu0
        %v778 = vadd.f32 %v381, %v777
        %v779 = vpop.f32.mrf.mxu0
        %v780 = vadd.f32 %v381, %v779
        %781 = vdwg.mxu0
        %782 = vmatpush.bf16.msra.mxu0 %v646
        %783 = vmatpush.bf16.msra.mxu0 %v642
        %784 = vmatpush.bf16.msra.mxu0 %v638
        %785 = vmatpush.bf16.msra.mxu0 %v634
        %786 = vmatpush.bf16.msra.mxu0 %v630
        %787 = vmatpush.bf16.msra.mxu0 %v626
        %788 = vmatpush.bf16.msra.mxu0 %v622
        %789 = vmatpush.bf16.msra.mxu0 %v618
        %790 = vmatmul.bf16.gmra.mxu0 %v389
        %v791 = vpop.f32.mrf.mxu0
        %v792 = vadd.f32 %v778, %v791
        %v793 = vpop.f32.mrf.mxu0
        %v794 = vadd.f32 %v780, %v793
        %795 = vdwg.mxu0
        %796 = vmatpush.bf16.msra.mxu0 %v615
        %797 = vmatpush.bf16.msra.mxu0 %v611
        %798 = vmatpush.bf16.msra.mxu0 %v607
        %799 = vmatpush.bf16.msra.mxu0 %v603
        %800 = vmatpush.bf16.msra.mxu0 %v599
        %801 = vmatpush.bf16.msra.mxu0 %v595
        %802 = vmatpush.bf16.msra.mxu0 %v591
        %803 = vmatpush.bf16.msra.mxu0 %v587
        %804 = vmatmul.bf16.gmra.mxu0 %v388
        %v805 = vpop.f32.mrf.mxu0
        %v806 = vadd.f32 %v381, %v805
        %v807 = vpop.f32.mrf.mxu0
        %v808 = vadd.f32 %v381, %v807
        %809 = vdwg.mxu0
        %810 = vmatpush.bf16.msra.mxu0 %v647
        %811 = vmatpush.bf16.msra.mxu0 %v643
        %812 = vmatpush.bf16.msra.mxu0 %v639
        %813 = vmatpush.bf16.msra.mxu0 %v635
        %814 = vmatpush.bf16.msra.mxu0 %v631
        %815 = vmatpush.bf16.msra.mxu0 %v627
        %816 = vmatpush.bf16.msra.mxu0 %v623
        %817 = vmatpush.bf16.msra.mxu0 %v619
        %818 = vmatmul.bf16.gmra.mxu0 %v389
        %v819 = vpop.f32.mrf.mxu0
        %v820 = vadd.f32 %v806, %v819
        %v821 = vpop.f32.mrf.mxu0
        %v822 = vadd.f32 %v808, %v821
        %823 = vdwg.mxu0
        %v824 = vtanh.pop %v736
        %v825 = vtanh.pop %v764
        %v826 = vtanh.pop %v792
        %v827 = vtanh.pop %v820
        %v828 = vtanh.pop %v738
        %v829 = vtanh.pop %v766
        %v830 = vtanh.pop %v794
        %v831 = vtanh.pop %v822
        %v896 = vunpack.c.l.b16 %v251
        %v897 = vunpack.c.h.b16 %v251
        %v898 = vunpack.c.l.b16 %v252
        %v899 = vunpack.c.h.b16 %v252
        %v900 = vunpack.c.l.b16 %v253
        %v901 = vunpack.c.h.b16 %v253
        %v902 = vunpack.c.l.b16 %v254
        %v903 = vunpack.c.h.b16 %v254
        %v904 = vunpack.c.l.b16 %v255
        %v905 = vunpack.c.h.b16 %v255
        %v906 = vunpack.c.l.b16 %v256
        %v907 = vunpack.c.h.b16 %v256
        %v908 = vunpack.c.l.b16 %v257
        %v909 = vunpack.c.h.b16 %v257
        %v910 = vunpack.c.l.b16 %v258
        %v911 = vunpack.c.h.b16 %v258
        %v912 = vunpack.c.l.b16 %v259
        %v913 = vunpack.c.h.b16 %v259
        %v914 = vunpack.c.l.b16 %v260
        %v915 = vunpack.c.h.b16 %v260
        %v916 = vunpack.c.l.b16 %v261
        %v917 = vunpack.c.h.b16 %v261
        %v918 = vunpack.c.l.b16 %v262
        %v919 = vunpack.c.h.b16 %v262
        %v920 = vunpack.c.l.b16 %v263
        %v921 = vunpack.c.h.b16 %v263
        %v922 = vunpack.c.l.b16 %v264
        %v923 = vunpack.c.h.b16 %v264
        %v924 = vunpack.c.l.b16 %v265
        %v925 = vunpack.c.h.b16 %v265
        %v926 = vunpack.c.l.b16 %v266
        %v927 = vunpack.c.h.b16 %v266
        %v928 = vunpack.c.l.b16 %v267
        %v929 = vunpack.c.h.b16 %v267
        %v930 = vunpack.c.l.b16 %v268
        %v931 = vunpack.c.h.b16 %v268
        %v932 = vunpack.c.l.b16 %v269
        %v933 = vunpack.c.h.b16 %v269
        %v934 = vunpack.c.l.b16 %v270
        %v935 = vunpack.c.h.b16 %v270
        %v936 = vunpack.c.l.b16 %v271
        %v937 = vunpack.c.h.b16 %v271
        %v938 = vunpack.c.l.b16 %v272
        %v939 = vunpack.c.h.b16 %v272
        %v940 = vunpack.c.l.b16 %v273
        %v941 = vunpack.c.h.b16 %v273
        %v942 = vunpack.c.l.b16 %v274
        %v943 = vunpack.c.h.b16 %v274
        %v944 = vunpack.c.l.b16 %v275
        %v945 = vunpack.c.h.b16 %v275
        %v946 = vunpack.c.l.b16 %v276
        %v947 = vunpack.c.h.b16 %v276
        %v948 = vunpack.c.l.b16 %v277
        %v949 = vunpack.c.h.b16 %v277
        %v950 = vunpack.c.l.b16 %v278
        %v951 = vunpack.c.h.b16 %v278
        %v952 = vunpack.c.l.b16 %v279
        %v953 = vunpack.c.h.b16 %v279
        %v954 = vunpack.c.l.b16 %v280
        %v955 = vunpack.c.h.b16 %v280
        %v956 = vunpack.c.l.b16 %v281
        %v957 = vunpack.c.h.b16 %v281
        %v958 = vunpack.c.l.b16 %v282
        %v959 = vunpack.c.h.b16 %v282
        %v960 = vunpack.c.l.b16 %v283
        %v961 = vunpack.c.h.b16 %v283
        %v962 = vunpack.c.l.b16 %v284
        %v963 = vunpack.c.h.b16 %v284
        %v964 = vunpack.c.l.b16 %v285
        %v965 = vunpack.c.h.b16 %v285
        %v966 = vunpack.c.l.b16 %v286
        %v967 = vunpack.c.h.b16 %v286
        %v968 = vunpack.c.l.b16 %v287
        %v969 = vunpack.c.h.b16 %v287
        %v970 = vunpack.c.l.b16 %v288
        %v971 = vunpack.c.h.b16 %v288
        %v972 = vunpack.c.l.b16 %v289
        %v973 = vunpack.c.h.b16 %v289
        %v974 = vunpack.c.l.b16 %v290
        %v975 = vunpack.c.h.b16 %v290
        %v976 = vunpack.c.l.b16 %v291
        %v977 = vunpack.c.h.b16 %v291
        %v978 = vunpack.c.l.b16 %v292
        %v979 = vunpack.c.h.b16 %v292
        %v980 = vunpack.c.l.b16 %v293
        %v981 = vunpack.c.h.b16 %v293
        %v982 = vunpack.c.l.b16 %v294
        %v983 = vunpack.c.h.b16 %v294
        %v984 = vunpack.c.l.b16 %v295
        %v985 = vunpack.c.h.b16 %v295
        %v986 = vunpack.c.l.b16 %v296
        %v987 = vunpack.c.h.b16 %v296
        %v988 = vunpack.c.l.b16 %v297
        %v989 = vunpack.c.h.b16 %v297
        %v990 = vunpack.c.l.b16 %v298
        %v991 = vunpack.c.h.b16 %v298
        %v992 = vunpack.c.l.b16 %v299
        %v993 = vunpack.c.h.b16 %v299
        %v994 = vunpack.c.l.b16 %v300
        %v995 = vunpack.c.h.b16 %v300
        %v996 = vunpack.c.l.b16 %v301
        %v997 = vunpack.c.h.b16 %v301
        %v998 = vunpack.c.l.b16 %v302
        %v999 = vunpack.c.h.b16 %v302
        %v1000 = vunpack.c.l.b16 %v303
        %v1001 = vunpack.c.h.b16 %v303
        %v1002 = vunpack.c.l.b16 %v304
        %v1003 = vunpack.c.h.b16 %v304
        %v1004 = vunpack.c.l.b16 %v305
        %v1005 = vunpack.c.h.b16 %v305
        %v1006 = vunpack.c.l.b16 %v306
        %v1007 = vunpack.c.h.b16 %v306
        %v1008 = vunpack.c.l.b16 %v307
        %v1009 = vunpack.c.h.b16 %v307
        %v1010 = vunpack.c.l.b16 %v308
        %v1011 = vunpack.c.h.b16 %v308
        %v1012 = vunpack.c.l.b16 %v309
        %v1013 = vunpack.c.h.b16 %v309
        %v1014 = vunpack.c.l.b16 %v310
        %v1015 = vunpack.c.h.b16 %v310
        %v1016 = vunpack.c.l.b16 %v311
        %v1017 = vunpack.c.h.b16 %v311
        %v1018 = vunpack.c.l.b16 %v312
        %v1019 = vunpack.c.h.b16 %v312
        %v1020 = vunpack.c.l.b16 %v313
        %v1021 = vunpack.c.h.b16 %v313
        %v1022 = vunpack.c.l.b16 %v314
        %v1023 = vunpack.c.h.b16 %v314
        %v1024 = vpack.c.b16 %v900, %v896
        %v1025 = vpack.c.b16 %v901, %v897
        %v1026 = vpack.c.b16 %v902, %v898
        %v1027 = vpack.c.b16 %v903, %v899
        %v1028 = vpack.c.b16 %v908, %v904
        %v1029 = vpack.c.b16 %v909, %v905
        %v1030 = vpack.c.b16 %v910, %v906
        %v1031 = vpack.c.b16 %v911, %v907
        %v1032 = vpack.c.b16 %v916, %v912
        %v1033 = vpack.c.b16 %v917, %v913
        %v1034 = vpack.c.b16 %v918, %v914
        %v1035 = vpack.c.b16 %v919, %v915
        %v1036 = vpack.c.b16 %v924, %v920
        %v1037 = vpack.c.b16 %v925, %v921
        %v1038 = vpack.c.b16 %v926, %v922
        %v1039 = vpack.c.b16 %v927, %v923
        %v1040 = vpack.c.b16 %v932, %v928
        %v1041 = vpack.c.b16 %v933, %v929
        %v1042 = vpack.c.b16 %v934, %v930
        %v1043 = vpack.c.b16 %v935, %v931
        %v1044 = vpack.c.b16 %v940, %v936
        %v1045 = vpack.c.b16 %v941, %v937
        %v1046 = vpack.c.b16 %v942, %v938
        %v1047 = vpack.c.b16 %v943, %v939
        %v1048 = vpack.c.b16 %v948, %v944
        %v1049 = vpack.c.b16 %v949, %v945
        %v1050 = vpack.c.b16 %v950, %v946
        %v1051 = vpack.c.b16 %v951, %v947
        %v1052 = vpack.c.b16 %v956, %v952
        %v1053 = vpack.c.b16 %v957, %v953
        %v1054 = vpack.c.b16 %v958, %v954
        %v1055 = vpack.c.b16 %v959, %v955
        %v1056 = vpack.c.b16 %v964, %v960
        %v1057 = vpack.c.b16 %v965, %v961
        %v1058 = vpack.c.b16 %v966, %v962
        %v1059 = vpack.c.b16 %v967, %v963
        %v1060 = vpack.c.b16 %v972, %v968
        %v1061 = vpack.c.b16 %v973, %v969
        %v1062 = vpack.c.b16 %v974, %v970
        %v1063 = vpack.c.b16 %v975, %v971
        %v1064 = vpack.c.b16 %v980, %v976
        %v1065 = vpack.c.b16 %v981, %v977
        %v1066 = vpack.c.b16 %v982, %v978
        %v1067 = vpack.c.b16 %v983, %v979
        %v1068 = vpack.c.b16 %v988, %v984
        %v1069 = vpack.c.b16 %v989, %v985
        %v1070 = vpack.c.b16 %v990, %v986
        %v1071 = vpack.c.b16 %v991, %v987
        %v1072 = vpack.c.b16 %v996, %v992
        %v1073 = vpack.c.b16 %v997, %v993
        %v1074 = vpack.c.b16 %v998, %v994
        %v1075 = vpack.c.b16 %v999, %v995
        %v1076 = vpack.c.b16 %v1004, %v1000
        %v1077 = vpack.c.b16 %v1005, %v1001
        %v1078 = vpack.c.b16 %v1006, %v1002
        %v1079 = vpack.c.b16 %v1007, %v1003
        %v1080 = vpack.c.b16 %v1012, %v1008
        %v1081 = vpack.c.b16 %v1013, %v1009
        %v1082 = vpack.c.b16 %v1014, %v1010
        %v1083 = vpack.c.b16 %v1015, %v1011
        %v1084 = vpack.c.b16 %v1020, %v1016
        %v1085 = vpack.c.b16 %v1021, %v1017
        %v1086 = vpack.c.b16 %v1022, %v1018
        %v1087 = vpack.c.b16 %v1023, %v1019
        %1152 = vmatpush.bf16.msra.mxu0 %v1052
        %1153 = vmatpush.bf16.msra.mxu0 %v1048
        %1154 = vmatpush.bf16.msra.mxu0 %v1044
        %1155 = vmatpush.bf16.msra.mxu0 %v1040
        %1156 = vmatpush.bf16.msra.mxu0 %v1036
        %1157 = vmatpush.bf16.msra.mxu0 %v1032
        %1158 = vmatpush.bf16.msra.mxu0 %v1028
        %1159 = vmatpush.bf16.msra.mxu0 %v1024
        %1160 = vmatmul.bf16.gmra.mxu0 %v388
        %v1161 = vpop.f32.mrf.mxu0
        %v1162 = vadd.f32 %v824, %v1161
        %v1163 = vpop.f32.mrf.mxu0
        %v1164 = vadd.f32 %v828, %v1163
        %1165 = vdwg.mxu0
        %1166 = vmatpush.bf16.msra.mxu0 %v1084
        %1167 = vmatpush.bf16.msra.mxu0 %v1080
        %1168 = vmatpush.bf16.msra.mxu0 %v1076
        %1169 = vmatpush.bf16.msra.mxu0 %v1072
        %1170 = vmatpush.bf16.msra.mxu0 %v1068
        %1171 = vmatpush.bf16.msra.mxu0 %v1064
        %1172 = vmatpush.bf16.msra.mxu0 %v1060
        %1173 = vmatpush.bf16.msra.mxu0 %v1056
        %1174 = vmatmul.bf16.gmra.mxu0 %v389
        %v1175 = vpop.f32.mrf.mxu0
        %v1176 = vadd.f32 %v1162, %v1175
        %v1177 = vpop.f32.mrf.mxu0
        %v1178 = vadd.f32 %v1164, %v1177
        %1179 = vdwg.mxu0
        %1180 = vmatpush.bf16.msra.mxu0 %v1053
        %1181 = vmatpush.bf16.msra.mxu0 %v1049
        %1182 = vmatpush.bf16.msra.mxu0 %v1045
        %1183 = vmatpush.bf16.msra.mxu0 %v1041
        %1184 = vmatpush.bf16.msra.mxu0 %v1037
        %1185 = vmatpush.bf16.msra.mxu0 %v1033
        %1186 = vmatpush.bf16.msra.mxu0 %v1029
        %1187 = vmatpush.bf16.msra.mxu0 %v1025
        %1188 = vmatmul.bf16.gmra.mxu0 %v388
        %v1189 = vpop.f32.mrf.mxu0
        %v1190 = vadd.f32 %v825, %v1189
        %v1191 = vpop.f32.mrf.mxu0
        %v1192 = vadd.f32 %v829, %v1191
        %1193 = vdwg.mxu0
        %1194 = vmatpush.bf16.msra.mxu0 %v1085
        %1195 = vmatpush.bf16.msra.mxu0 %v1081
        %1196 = vmatpush.bf16.msra.mxu0 %v1077
        %1197 = vmatpush.bf16.msra.mxu0 %v1073
        %1198 = vmatpush.bf16.msra.mxu0 %v1069
        %1199 = vmatpush.bf16.msra.mxu0 %v1065
        %1200 = vmatpush.bf16.msra.mxu0 %v1061
        %1201 = vmatpush.bf16.msra.mxu0 %v1057
        %1202 = vmatmul.bf16.gmra.mxu0 %v389
        %v1203 = vpop.f32.mrf.mxu0
        %v1204 = vadd.f32 %v1190, %v1203
        %v1205 = vpop.f32.mrf.mxu0
        %v1206 = vadd.f32 %v1192, %v1205
        %1207 = vdwg.mxu0
        %1208 = vmatpush.bf16.msra.mxu0 %v1054
        %1209 = vmatpush.bf16.msra.mxu0 %v1050
        %1210 = vmatpush.bf16.msra.mxu0 %v1046
        %1211 = vmatpush.bf16.msra.mxu0 %v1042
        %1212 = vmatpush.bf16.msra.mxu0 %v1038
        %1213 = vmatpush.bf16.msra.mxu0 %v1034
        %1214 = vmatpush.bf16.msra.mxu0 %v1030
        %1215 = vmatpush.bf16.msra.mxu0 %v1026
        %1216 = vmatmul.bf16.gmra.mxu0 %v388
        %v1217 = vpop.f32.mrf.mxu0
        %v1218 = vadd.f32 %v826, %v1217
        %v1219 = vpop.f32.mrf.mxu0
        %v1220 = vadd.f32 %v830, %v1219
        %1221 = vdwg.mxu0
        %1222 = vmatpush.bf16.msra.mxu0 %v1086
        %1223 = vmatpush.bf16.msra.mxu0 %v1082
        %1224 = vmatpush.bf16.msra.mxu0 %v1078
        %1225 = vmatpush.bf16.msra.mxu0 %v1074
        %1226 = vmatpush.bf16.msra.mxu0 %v1070
        %1227 = vmatpush.bf16.msra.mxu0 %v1066
        %1228 = vmatpush.bf16.msra.mxu0 %v1062
        %1229 = vmatpush.bf16.msra.mxu0 %v1058
        %1230 = vmatmul.bf16.gmra.mxu0 %v389
        %v1231 = vpop.f32.mrf.mxu0
        %v1232 = vadd.f32 %v1218, %v1231
        %v1233 = vpop.f32.mrf.mxu0
        %v1234 = vadd.f32 %v1220, %v1233
        %1235 = vdwg.mxu0
        %1236 = vmatpush.bf16.msra.mxu0 %v1055
        %1237 = vmatpush.bf16.msra.mxu0 %v1051
        %1238 = vmatpush.bf16.msra.mxu0 %v1047
        %1239 = vmatpush.bf16.msra.mxu0 %v1043
        %1240 = vmatpush.bf16.msra.mxu0 %v1039
        %1241 = vmatpush.bf16.msra.mxu0 %v1035
        %1242 = vmatpush.bf16.msra.mxu0 %v1031
        %1243 = vmatpush.bf16.msra.mxu0 %v1027
        %1244 = vmatmul.bf16.gmra.mxu0 %v388
        %v1245 = vpop.f32.mrf.mxu0
        %v1246 = vadd.f32 %v827, %v1245
        %v1247 = vpop.f32.mrf.mxu0
        %v1248 = vadd.f32 %v831, %v1247
        %1249 = vdwg.mxu0
        %1250 = vmatpush.bf16.msra.mxu0 %v1087
        %1251 = vmatpush.bf16.msra.mxu0 %v1083
        %1252 = vmatpush.bf16.msra.mxu0 %v1079
        %1253 = vmatpush.bf16.msra.mxu0 %v1075
        %1254 = vmatpush.bf16.msra.mxu0 %v1071
        %1255 = vmatpush.bf16.msra.mxu0 %v1067
        %1256 = vmatpush.bf16.msra.mxu0 %v1063
        %1257 = vmatpush.bf16.msra.mxu0 %v1059
        %1258 = vmatmul.bf16.gmra.mxu0 %v389
        %v1259 = vpop.f32.mrf.mxu0
        %v1260 = vadd.f32 %v1246, %v1259
        %v1261 = vpop.f32.mrf.mxu0
        %v1262 = vadd.f32 %v1248, %v1261
        %1263 = vdwg.mxu0
        %s1264 = scalar_lea.vmem %s215, 1024 [#allocation6]
        %v1265 = vld [vmem:[%s1264] sm:$0xff]
        %v1266 = vld [vmem:[%s1264 + $0x8] sm:$0xff]
        %v1267 = vld [vmem:[%s1264 + $0x10] sm:$0xff]
        %v1268 = vld [vmem:[%s1264 + $0x18] sm:$0xff]
        %v1269 = vld [vmem:[%s1264 + $0x20] sm:$0xff]
        %v1270 = vld [vmem:[%s1264 + $0x28] sm:$0xff]
        %v1271 = vld [vmem:[%s1264 + $0x30] sm:$0xff]
        %v1272 = vld [vmem:[%s1264 + $0x38] sm:$0xff]
        %v1273 = vld [vmem:[%s1264 + $0x40] sm:$0xff]
        %v1274 = vld [vmem:[%s1264 + $0x48] sm:$0xff]
        %v1275 = vld [vmem:[%s1264 + $0x50] sm:$0xff]
        %v1276 = vld [vmem:[%s1264 + $0x58] sm:$0xff]
        %v1277 = vld [vmem:[%s1264 + $0x60] sm:$0xff]
        %v1278 = vld [vmem:[%s1264 + $0x68] sm:$0xff]
        %v1279 = vld [vmem:[%s1264 + $0x70] sm:$0xff]
        %v1280 = vld [vmem:[%s1264 + $0x78] sm:$0xff]
        %v1281 = vld [vmem:[%s1264 + $0x80] sm:$0xff]
        %v1282 = vld [vmem:[%s1264 + $0x88] sm:$0xff]
        %v1283 = vld [vmem:[%s1264 + $0x90] sm:$0xff]
        %v1284 = vld [vmem:[%s1264 + $0x98] sm:$0xff]
        %v1285 = vld [vmem:[%s1264 + $0xa0] sm:$0xff]
        %v1286 = vld [vmem:[%s1264 + $0xa8] sm:$0xff]
        %v1287 = vld [vmem:[%s1264 + $0xb0] sm:$0xff]
        %v1288 = vld [vmem:[%s1264 + $0xb8] sm:$0xff]
        %v1289 = vld [vmem:[%s1264 + $0xc0] sm:$0xff]
        %v1290 = vld [vmem:[%s1264 + $0xc8] sm:$0xff]
        %v1291 = vld [vmem:[%s1264 + $0xd0] sm:$0xff]
        %v1292 = vld [vmem:[%s1264 + $0xd8] sm:$0xff]
        %v1293 = vld [vmem:[%s1264 + $0xe0] sm:$0xff]
        %v1294 = vld [vmem:[%s1264 + $0xe8] sm:$0xff]
        %v1295 = vld [vmem:[%s1264 + $0xf0] sm:$0xff]
        %v1296 = vld [vmem:[%s1264 + $0xf8] sm:$0xff]
        %v1297 = vld [vmem:[%s1264 + $0x100] sm:$0xff]
        %v1298 = vld [vmem:[%s1264 + $0x108] sm:$0xff]
        %v1299 = vld [vmem:[%s1264 + $0x110] sm:$0xff]
        %v1300 = vld [vmem:[%s1264 + $0x118] sm:$0xff]
        %v1301 = vld [vmem:[%s1264 + $0x120] sm:$0xff]
        %v1302 = vld [vmem:[%s1264 + $0x128] sm:$0xff]
        %v1303 = vld [vmem:[%s1264 + $0x130] sm:$0xff]
        %v1304 = vld [vmem:[%s1264 + $0x138] sm:$0xff]
        %v1305 = vld [vmem:[%s1264 + $0x140] sm:$0xff]
        %v1306 = vld [vmem:[%s1264 + $0x148] sm:$0xff]
        %v1307 = vld [vmem:[%s1264 + $0x150] sm:$0xff]
        %v1308 = vld [vmem:[%s1264 + $0x158] sm:$0xff]
        %v1309 = vld [vmem:[%s1264 + $0x160] sm:$0xff]
        %v1310 = vld [vmem:[%s1264 + $0x168] sm:$0xff]
        %v1311 = vld [vmem:[%s1264 + $0x170] sm:$0xff]
        %v1312 = vld [vmem:[%s1264 + $0x178] sm:$0xff]
        %v1313 = vld [vmem:[%s1264 + $0x180] sm:$0xff]
        %v1314 = vld [vmem:[%s1264 + $0x188] sm:$0xff]
        %v1315 = vld [vmem:[%s1264 + $0x190] sm:$0xff]
        %v1316 = vld [vmem:[%s1264 + $0x198] sm:$0xff]
        %v1317 = vld [vmem:[%s1264 + $0x1a0] sm:$0xff]
        %v1318 = vld [vmem:[%s1264 + $0x1a8] sm:$0xff]
        %v1319 = vld [vmem:[%s1264 + $0x1b0] sm:$0xff]
        %v1320 = vld [vmem:[%s1264 + $0x1b8] sm:$0xff]
        %v1321 = vld [vmem:[%s1264 + $0x1c0] sm:$0xff]
        %v1322 = vld [vmem:[%s1264 + $0x1c8] sm:$0xff]
        %v1323 = vld [vmem:[%s1264 + $0x1d0] sm:$0xff]
        %v1324 = vld [vmem:[%s1264 + $0x1d8] sm:$0xff]
        %v1325 = vld [vmem:[%s1264 + $0x1e0] sm:$0xff]
        %v1326 = vld [vmem:[%s1264 + $0x1e8] sm:$0xff]
        %v1327 = vld [vmem:[%s1264 + $0x1f0] sm:$0xff]
        %v1328 = vld [vmem:[%s1264 + $0x1f8] sm:$0xff]
        %s1329 = sld [smem:[#allocation2 + $0x1]]
        %v1330 = vstv %s1329
        %v1395 = vunpack.c.l.b16 %v1265
        %v1396 = vunpack.c.h.b16 %v1265
        %v1397 = vunpack.c.l.b16 %v1266
        %v1398 = vunpack.c.h.b16 %v1266
        %v1399 = vunpack.c.l.b16 %v1267
        %v1400 = vunpack.c.h.b16 %v1267
        %v1401 = vunpack.c.l.b16 %v1268
        %v1402 = vunpack.c.h.b16 %v1268
        %v1403 = vunpack.c.l.b16 %v1269
        %v1404 = vunpack.c.h.b16 %v1269
        %v1405 = vunpack.c.l.b16 %v1270
        %v1406 = vunpack.c.h.b16 %v1270
        %v1407 = vunpack.c.l.b16 %v1271
        %v1408 = vunpack.c.h.b16 %v1271
        %v1409 = vunpack.c.l.b16 %v1272
        %v1410 = vunpack.c.h.b16 %v1272
        %v1411 = vunpack.c.l.b16 %v1273
        %v1412 = vunpack.c.h.b16 %v1273
        %v1413 = vunpack.c.l.b16 %v1274
        %v1414 = vunpack.c.h.b16 %v1274
        %v1415 = vunpack.c.l.b16 %v1275
        %v1416 = vunpack.c.h.b16 %v1275
        %v1417 = vunpack.c.l.b16 %v1276
        %v1418 = vunpack.c.h.b16 %v1276
        %v1419 = vunpack.c.l.b16 %v1277
        %v1420 = vunpack.c.h.b16 %v1277
        %v1421 = vunpack.c.l.b16 %v1278
        %v1422 = vunpack.c.h.b16 %v1278
        %v1423 = vunpack.c.l.b16 %v1279
        %v1424 = vunpack.c.h.b16 %v1279
        %v1425 = vunpack.c.l.b16 %v1280
        %v1426 = vunpack.c.h.b16 %v1280
        %v1427 = vunpack.c.l.b16 %v1281
        %v1428 = vunpack.c.h.b16 %v1281
        %v1429 = vunpack.c.l.b16 %v1282
        %v1430 = vunpack.c.h.b16 %v1282
        %v1431 = vunpack.c.l.b16 %v1283
        %v1432 = vunpack.c.h.b16 %v1283
        %v1433 = vunpack.c.l.b16 %v1284
        %v1434 = vunpack.c.h.b16 %v1284
        %v1435 = vunpack.c.l.b16 %v1285
        %v1436 = vunpack.c.h.b16 %v1285
        %v1437 = vunpack.c.l.b16 %v1286
        %v1438 = vunpack.c.h.b16 %v1286
        %v1439 = vunpack.c.l.b16 %v1287
        %v1440 = vunpack.c.h.b16 %v1287
        %v1441 = vunpack.c.l.b16 %v1288
        %v1442 = vunpack.c.h.b16 %v1288
        %v1443 = vunpack.c.l.b16 %v1289
        %v1444 = vunpack.c.h.b16 %v1289
        %v1445 = vunpack.c.l.b16 %v1290
        %v1446 = vunpack.c.h.b16 %v1290
        %v1447 = vunpack.c.l.b16 %v1291
        %v1448 = vunpack.c.h.b16 %v1291
        %v1449 = vunpack.c.l.b16 %v1292
        %v1450 = vunpack.c.h.b16 %v1292
        %v1451 = vunpack.c.l.b16 %v1293
        %v1452 = vunpack.c.h.b16 %v1293
        %v1453 = vunpack.c.l.b16 %v1294
        %v1454 = vunpack.c.h.b16 %v1294
        %v1455 = vunpack.c.l.b16 %v1295
        %v1456 = vunpack.c.h.b16 %v1295
        %v1457 = vunpack.c.l.b16 %v1296
        %v1458 = vunpack.c.h.b16 %v1296
        %v1459 = vunpack.c.l.b16 %v1297
        %v1460 = vunpack.c.h.b16 %v1297
        %v1461 = vunpack.c.l.b16 %v1298
        %v1462 = vunpack.c.h.b16 %v1298
        %v1463 = vunpack.c.l.b16 %v1299
        %v1464 = vunpack.c.h.b16 %v1299
        %v1465 = vunpack.c.l.b16 %v1300
        %v1466 = vunpack.c.h.b16 %v1300
        %v1467 = vunpack.c.l.b16 %v1301
        %v1468 = vunpack.c.h.b16 %v1301
        %v1469 = vunpack.c.l.b16 %v1302
        %v1470 = vunpack.c.h.b16 %v1302
        %v1471 = vunpack.c.l.b16 %v1303
        %v1472 = vunpack.c.h.b16 %v1303
        %v1473 = vunpack.c.l.b16 %v1304
        %v1474 = vunpack.c.h.b16 %v1304
        %v1475 = vunpack.c.l.b16 %v1305
        %v1476 = vunpack.c.h.b16 %v1305
        %v1477 = vunpack.c.l.b16 %v1306
        %v1478 = vunpack.c.h.b16 %v1306
        %v1479 = vunpack.c.l.b16 %v1307
        %v1480 = vunpack.c.h.b16 %v1307
        %v1481 = vunpack.c.l.b16 %v1308
        %v1482 = vunpack.c.h.b16 %v1308
        %v1483 = vunpack.c.l.b16 %v1309
        %v1484 = vunpack.c.h.b16 %v1309
        %v1485 = vunpack.c.l.b16 %v1310
        %v1486 = vunpack.c.h.b16 %v1310
        %v1487 = vunpack.c.l.b16 %v1311
        %v1488 = vunpack.c.h.b16 %v1311
        %v1489 = vunpack.c.l.b16 %v1312
        %v1490 = vunpack.c.h.b16 %v1312
        %v1491 = vunpack.c.l.b16 %v1313
        %v1492 = vunpack.c.h.b16 %v1313
        %v1493 = vunpack.c.l.b16 %v1314
        %v1494 = vunpack.c.h.b16 %v1314
        %v1495 = vunpack.c.l.b16 %v1315
        %v1496 = vunpack.c.h.b16 %v1315
        %v1497 = vunpack.c.l.b16 %v1316
        %v1498 = vunpack.c.h.b16 %v1316
        %v1499 = vunpack.c.l.b16 %v1317
        %v1500 = vunpack.c.h.b16 %v1317
        %v1501 = vunpack.c.l.b16 %v1318
        %v1502 = vunpack.c.h.b16 %v1318
        %v1503 = vunpack.c.l.b16 %v1319
        %v1504 = vunpack.c.h.b16 %v1319
        %v1505 = vunpack.c.l.b16 %v1320
        %v1506 = vunpack.c.h.b16 %v1320
        %v1507 = vunpack.c.l.b16 %v1321
        %v1508 = vunpack.c.h.b16 %v1321
        %v1509 = vunpack.c.l.b16 %v1322
        %v1510 = vunpack.c.h.b16 %v1322
        %v1511 = vunpack.c.l.b16 %v1323
        %v1512 = vunpack.c.h.b16 %v1323
        %v1513 = vunpack.c.l.b16 %v1324
        %v1514 = vunpack.c.h.b16 %v1324
        %v1515 = vunpack.c.l.b16 %v1325
        %v1516 = vunpack.c.h.b16 %v1325
        %v1517 = vunpack.c.l.b16 %v1326
        %v1518 = vunpack.c.h.b16 %v1326
        %v1519 = vunpack.c.l.b16 %v1327
        %v1520 = vunpack.c.h.b16 %v1327
        %v1521 = vunpack.c.l.b16 %v1328
        %v1522 = vunpack.c.h.b16 %v1328
        %v1523 = vpack.c.b16 %v1399, %v1395
        %v1524 = vpack.c.b16 %v1400, %v1396
        %v1525 = vpack.c.b16 %v1401, %v1397
        %v1526 = vpack.c.b16 %v1402, %v1398
        %v1527 = vpack.c.b16 %v1407, %v1403
        %v1528 = vpack.c.b16 %v1408, %v1404
        %v1529 = vpack.c.b16 %v1409, %v1405
        %v1530 = vpack.c.b16 %v1410, %v1406
        %v1531 = vpack.c.b16 %v1415, %v1411
        %v1532 = vpack.c.b16 %v1416, %v1412
        %v1533 = vpack.c.b16 %v1417, %v1413
        %v1534 = vpack.c.b16 %v1418, %v1414
        %v1535 = vpack.c.b16 %v1423, %v1419
        %v1536 = vpack.c.b16 %v1424, %v1420
        %v1537 = vpack.c.b16 %v1425, %v1421
        %v1538 = vpack.c.b16 %v1426, %v1422
        %v1539 = vpack.c.b16 %v1431, %v1427
        %v1540 = vpack.c.b16 %v1432, %v1428
        %v1541 = vpack.c.b16 %v1433, %v1429
        %v1542 = vpack.c.b16 %v1434, %v1430
        %v1543 = vpack.c.b16 %v1439, %v1435
        %v1544 = vpack.c.b16 %v1440, %v1436
        %v1545 = vpack.c.b16 %v1441, %v1437
        %v1546 = vpack.c.b16 %v1442, %v1438
        %v1547 = vpack.c.b16 %v1447, %v1443
        %v1548 = vpack.c.b16 %v1448, %v1444
        %v1549 = vpack.c.b16 %v1449, %v1445
        %v1550 = vpack.c.b16 %v1450, %v1446
        %v1551 = vpack.c.b16 %v1455, %v1451
        %v1552 = vpack.c.b16 %v1456, %v1452
        %v1553 = vpack.c.b16 %v1457, %v1453
        %v1554 = vpack.c.b16 %v1458, %v1454
        %v1555 = vpack.c.b16 %v1463, %v1459
        %v1556 = vpack.c.b16 %v1464, %v1460
        %v1557 = vpack.c.b16 %v1465, %v1461
        %v1558 = vpack.c.b16 %v1466, %v1462
        %v1559 = vpack.c.b16 %v1471, %v1467
        %v1560 = vpack.c.b16 %v1472, %v1468
        %v1561 = vpack.c.b16 %v1473, %v1469
        %v1562 = vpack.c.b16 %v1474, %v1470
        %v1563 = vpack.c.b16 %v1479, %v1475
        %v1564 = vpack.c.b16 %v1480, %v1476
        %v1565 = vpack.c.b16 %v1481, %v1477
        %v1566 = vpack.c.b16 %v1482, %v1478
        %v1567 = vpack.c.b16 %v1487, %v1483
        %v1568 = vpack.c.b16 %v1488, %v1484
        %v1569 = vpack.c.b16 %v1489, %v1485
        %v1570 = vpack.c.b16 %v1490, %v1486
        %v1571 = vpack.c.b16 %v1495, %v1491
        %v1572 = vpack.c.b16 %v1496, %v1492
        %v1573 = vpack.c.b16 %v1497, %v1493
        %v1574 = vpack.c.b16 %v1498, %v1494
        %v1575 = vpack.c.b16 %v1503, %v1499
        %v1576 = vpack.c.b16 %v1504, %v1500
        %v1577 = vpack.c.b16 %v1505, %v1501
        %v1578 = vpack.c.b16 %v1506, %v1502
        %v1579 = vpack.c.b16 %v1511, %v1507
        %v1580 = vpack.c.b16 %v1512, %v1508
        %v1581 = vpack.c.b16 %v1513, %v1509
        %v1582 = vpack.c.b16 %v1514, %v1510
        %v1583 = vpack.c.b16 %v1519, %v1515
        %v1584 = vpack.c.b16 %v1520, %v1516
        %v1585 = vpack.c.b16 %v1521, %v1517
        %v1586 = vpack.c.b16 %v1522, %v1518
        %1651 = vmatpush.bf16.msra.mxu0 %v1551
        %1652 = vmatpush.bf16.msra.mxu0 %v1547
        %1653 = vmatpush.bf16.msra.mxu0 %v1543
        %1654 = vmatpush.bf16.msra.mxu0 %v1539
        %1655 = vmatpush.bf16.msra.mxu0 %v1535
        %1656 = vmatpush.bf16.msra.mxu0 %v1531
        %1657 = vmatpush.bf16.msra.mxu0 %v1527
        %1658 = vmatpush.bf16.msra.mxu0 %v1523
        %1659 = vmatmul.bf16.gmra.mxu0 %v388
        %v1660 = vpop.f32.mrf.mxu0
        %v1661 = vadd.f32 %v1330, %v1660
        %v1662 = vpop.f32.mrf.mxu0
        %v1663 = vadd.f32 %v1330, %v1662
        %1664 = vdwg.mxu0
        %1665 = vmatpush.bf16.msra.mxu0 %v1583
        %1666 = vmatpush.bf16.msra.mxu0 %v1579
        %1667 = vmatpush.bf16.msra.mxu0 %v1575
        %1668 = vmatpush.bf16.msra.mxu0 %v1571
        %1669 = vmatpush.bf16.msra.mxu0 %v1567
        %1670 = vmatpush.bf16.msra.mxu0 %v1563
        %1671 = vmatpush.bf16.msra.mxu0 %v1559
        %1672 = vmatpush.bf16.msra.mxu0 %v1555
        %1673 = vmatmul.bf16.gmra.mxu0 %v389
        %v1674 = vpop.f32.mrf.mxu0
        %v1675 = vadd.f32 %v1661, %v1674
        %v1676 = vpop.f32.mrf.mxu0
        %v1677 = vadd.f32 %v1663, %v1676
        %1678 = vdwg.mxu0
        %1679 = vmatpush.bf16.msra.mxu0 %v1552
        %1680 = vmatpush.bf16.msra.mxu0 %v1548
        %1681 = vmatpush.bf16.msra.mxu0 %v1544
        %1682 = vmatpush.bf16.msra.mxu0 %v1540
        %1683 = vmatpush.bf16.msra.mxu0 %v1536
        %1684 = vmatpush.bf16.msra.mxu0 %v1532
        %1685 = vmatpush.bf16.msra.mxu0 %v1528
        %1686 = vmatpush.bf16.msra.mxu0 %v1524
        %1687 = vmatmul.bf16.gmra.mxu0 %v388
        %v1688 = vpop.f32.mrf.mxu0
        %v1689 = vadd.f32 %v1330, %v1688
        %v1690 = vpop.f32.mrf.mxu0
        %v1691 = vadd.f32 %v1330, %v1690
        %1692 = vdwg.mxu0
        %1693 = vmatpush.bf16.msra.mxu0 %v1584
        %1694 = vmatpush.bf16.msra.mxu0 %v1580
        %1695 = vmatpush.bf16.msra.mxu0 %v1576
        %1696 = vmatpush.bf16.msra.mxu0 %v1572
        %1697 = vmatpush.bf16.msra.mxu0 %v1568
        %1698 = vmatpush.bf16.msra.mxu0 %v1564
        %1699 = vmatpush.bf16.msra.mxu0 %v1560
        %1700 = vmatpush.bf16.msra.mxu0 %v1556
        %1701 = vmatmul.bf16.gmra.mxu0 %v389
        %v1702 = vpop.f32.mrf.mxu0
        %v1703 = vadd.f32 %v1689, %v1702
        %v1704 = vpop.f32.mrf.mxu0
        %v1705 = vadd.f32 %v1691, %v1704
        %1706 = vdwg.mxu0
        %1707 = vmatpush.bf16.msra.mxu0 %v1553
        %1708 = vmatpush.bf16.msra.mxu0 %v1549
        %1709 = vmatpush.bf16.msra.mxu0 %v1545
        %1710 = vmatpush.bf16.msra.mxu0 %v1541
        %1711 = vmatpush.bf16.msra.mxu0 %v1537
        %1712 = vmatpush.bf16.msra.mxu0 %v1533
        %1713 = vmatpush.bf16.msra.mxu0 %v1529
        %1714 = vmatpush.bf16.msra.mxu0 %v1525
        %1715 = vmatmul.bf16.gmra.mxu0 %v388
        %v1716 = vpop.f32.mrf.mxu0
        %v1717 = vadd.f32 %v1330, %v1716
        %v1718 = vpop.f32.mrf.mxu0
        %v1719 = vadd.f32 %v1330, %v1718
        %1720 = vdwg.mxu0
        %1721 = vmatpush.bf16.msra.mxu0 %v1585
        %1722 = vmatpush.bf16.msra.mxu0 %v1581
        %1723 = vmatpush.bf16.msra.mxu0 %v1577
        %1724 = vmatpush.bf16.msra.mxu0 %v1573
        %1725 = vmatpush.bf16.msra.mxu0 %v1569
        %1726 = vmatpush.bf16.msra.mxu0 %v1565
        %1727 = vmatpush.bf16.msra.mxu0 %v1561
        %1728 = vmatpush.bf16.msra.mxu0 %v1557
        %1729 = vmatmul.bf16.gmra.mxu0 %v389
        %v1730 = vpop.f32.mrf.mxu0
        %v1731 = vadd.f32 %v1717, %v1730
        %v1732 = vpop.f32.mrf.mxu0
        %v1733 = vadd.f32 %v1719, %v1732
        %1734 = vdwg.mxu0
        %1735 = vmatpush.bf16.msra.mxu0 %v1554
        %1736 = vmatpush.bf16.msra.mxu0 %v1550
        %1737 = vmatpush.bf16.msra.mxu0 %v1546
        %1738 = vmatpush.bf16.msra.mxu0 %v1542
        %1739 = vmatpush.bf16.msra.mxu0 %v1538
        %1740 = vmatpush.bf16.msra.mxu0 %v1534
        %1741 = vmatpush.bf16.msra.mxu0 %v1530
        %1742 = vmatpush.bf16.msra.mxu0 %v1526
        %1743 = vmatmul.bf16.gmra.mxu0 %v388
        %v1744 = vpop.f32.mrf.mxu0
        %v1745 = vadd.f32 %v1330, %v1744
        %v1746 = vpop.f32.mrf.mxu0
        %v1747 = vadd.f32 %v1330, %v1746
        %1748 = vdwg.mxu0
        %1749 = vmatpush.bf16.msra.mxu0 %v1586
        %1750 = vmatpush.bf16.msra.mxu0 %v1582
        %1751 = vmatpush.bf16.msra.mxu0 %v1578
        %1752 = vmatpush.bf16.msra.mxu0 %v1574
        %1753 = vmatpush.bf16.msra.mxu0 %v1570
        %1754 = vmatpush.bf16.msra.mxu0 %v1566
        %1755 = vmatpush.bf16.msra.mxu0 %v1562
        %1756 = vmatpush.bf16.msra.mxu0 %v1558
        %1757 = vmatmul.bf16.gmra.mxu0 %v389
        %v1758 = vpop.f32.mrf.mxu0
        %v1759 = vadd.f32 %v1745, %v1758
        %v1760 = vpop.f32.mrf.mxu0
        %v1761 = vadd.f32 %v1747, %v1760
        %1762 = vdwg.mxu0
        %v1763 = vtanh.pop %v1675
        %v1764 = vtanh.pop %v1703
        %v1765 = vtanh.pop %v1731
        %v1766 = vtanh.pop %v1759
        %v1767 = vtanh.pop %v1677
        %v1768 = vtanh.pop %v1705
        %v1769 = vtanh.pop %v1733
        %v1770 = vtanh.pop %v1761
        %v1771 = vadd.f32 %v1176, %v1763
        %v1772 = vadd.f32 %v1204, %v1764
        %v1773 = vadd.f32 %v1232, %v1765
        %v1774 = vadd.f32 %v1260, %v1766
        %v1775 = vadd.f32 %v1178, %v1767
        %v1776 = vadd.f32 %v1206, %v1768
        %v1777 = vadd.f32 %v1234, %v1769
        %v1778 = vadd.f32 %v1262, %v1770
        %1779 = vst [vmem:[%s244] sm:$0xff] %v1771
        %1780 = vst [vmem:[%s244 + $0x8] sm:$0xff] %v1772
        %1781 = vst [vmem:[%s244 + $0x10] sm:$0xff] %v1773
        %1782 = vst [vmem:[%s244 + $0x18] sm:$0xff] %v1774
        %1783 = vst [vmem:[%s244 + $0x20] sm:$0xff] %v1775
        %1784 = vst [vmem:[%s244 + $0x28] sm:$0xff] %v1776
        %1785 = vst [vmem:[%s244 + $0x30] sm:$0xff] %v1777
        %1786 = vst [vmem:[%s244 + $0x38] sm:$0xff] %v1778
        %s1787 = sand.u32 %s117, 1
        %s1788 = scalar_lea.sflag [#allocation4], %s1787
        %s1789 = sand.u32 %s117, 1
        %s1790 = smul.addr %s1789, 64
        %s1791 = scalar_lea.vmem [#allocation9], %s1790
        // Predicated region
        $region45: #{tpu_custom_call.1} parent=31 // pred_check
          %p1792 = pneg %p127
        $region46: #{tpu_custom_call.1} parent=31 // pred_check_branch
          %1794 = sbr.rel (%p1792) target = $region48
        $region47: #{tpu_custom_call.1} parent=31 // pred_region
          %s1795 = smul.u32 2, %s27
          %s1796 = smul.u32 4, %s26
          %1798 = vsyncadd %s1788, 0
          %s1799 = smul.addr %s1795, 8
          %s1800 = sadd.s32 %s1796, %s1799
          %s1801 = smul.addr %s1800, 8
          %s1802 = scalar_lea.hbm %s3, %s1801
          %s1803 = sshll.u32 %s1791, 4
          %s1804 = int_to_ptr.vmem [resolvable:$true] %s1803
          %s1805 = sshll.u32 %s1802, 4
          %s1806 = int_to_ptr.hbm [resolvable:$true] %s1805
          %1811 = dma.vmem_to_hbm [thread:$0]  %s1804, 1024, %s1806, %s1788, 512, 1024, 32
        $region48: #{tpu_custom_call.1} parent=31 // pred_fallthru
          _
      $region32: #{tpu_custom_call.1} parent=5 // pred_fallthru
        _
      %p1812 = scmp.le.s32.totalorder 2, %s17
      // Predicated region
      $region49: #{tpu_custom_call.1} parent=5 // pred_check
        %p1813 = pneg %p1812
      $region50: #{tpu_custom_call.1} parent=5 // pred_check_branch
        %1815 = sbr.rel (%p1813) target = $region52
      $region51: #{tpu_custom_call.1} parent=5 // pred_region
        %s1816 = ssub.s32 %s17, 2
        // Predicated region
        $region53: #{tpu_custom_call.1} parent=51 // pred_check
          %p1817 = pneg %p133
        $region54: #{tpu_custom_call.1} parent=51 // pred_check_branch
          %1819 = sbr.rel (%p1817) target = $region56
        $region55: #{tpu_custom_call.1} parent=51 // pred_region
          %s1820 = sand.u32 %s118, 1
          %s1821 = scalar_lea.sflag [#allocation4], %s1820
          %s1822 = sand.u32 %s118, 1
          %s1823 = smul.addr %s1822, 64
          %s1824 = scalar_lea.vmem [#allocation9], %s1823
          %1826 = dma.done %s1821, 1024
        $region56: #{tpu_custom_call.1} parent=51 // pred_fallthru
          _
      $region52: #{tpu_custom_call.1} parent=5 // pred_fallthru
        _
    $region6: #{tpu_custom_call.1} parent=1 // loop_footer
      %s21 = sadd.s32 1, %s17
    $region7: #{tpu_custom_call.1} parent=1 // loop_footer_branch
      %16 = sbr.rel target = $region3
    $region8: #{tpu_custom_call.1} parent=1 // loop_exit
      _
    %1827 = vsyncpa [#allocation3], 1
    %s1828 = scalar_lea.sflag [#allocation3], 1
    %1829 = vsyncpa %s1828, 1
    %1830 = vsyncpa [#allocation8], 1
    %1831 = vsyncpa [#allocation4], 1
    %s1832 = scalar_lea.sflag [#allocation4], 1
    %1833 = vsyncpa %s1832, 1
    %1834 = vsyncpa [#allocation5], 1
    %s1835 = scalar_lea.sflag [#allocation5], 1
    %1836 = vsyncpa %s1835, 1

</llo_original>
